<compile_context>
chip_gen: v7x
topology: tpu7x:2x2x1
jax: 0.10.0
libtpu: 0.0.40
codegen_flags: <defaults>
</compile_context>

<pallas_src>
import math

import jax
import jax.numpy as jnp
from jax import lax
from jax.experimental import pallas as pl
from jax.experimental.pallas import tpu as pltpu


_SUBLANE = 8  # f32 sublane tile


def _round_up(n, m):
    return ((n + m - 1) // m) * m


# ----------------------------------------------------------------------------
# Fused whole-model kernel (built for static T, padded batch Bp, H, num_layers)
# ----------------------------------------------------------------------------
def _make_fused_gru_kernel(T, Bp, H, num_layers):
    def kernel(*refs):
        it = iter(refs)
        x_ref = next(it)                                       # (T*Bp, Din)
        layer_refs = [(next(it), next(it), next(it), next(it))
                      for _ in range(num_layers)]              # (wi, wh, b_in, b_hn)
        fcw_ref = next(it)                                     # (1, H)
        fcb_ref = next(it)                                     # (1, 1)
        out_ref = next(it)                                     # (Bp, 1)
        gates_ref = next(it)                                   # (T*Bp, 3H) scratch
        seq_ref = next(it)                                     # (T*Bp, H)  scratch

        h_last = None
        for l, (wi_ref, wh_ref, bin_ref, bhn_ref) in enumerate(layer_refs):
            inp = x_ref[...] if l == 0 else seq_ref[...]

            # Hoisted, time-parallel input projection for all three gates,
            # with foldable biases added once per sequence.
            gates_ref[...] = (
                jnp.dot(inp, wi_ref[...], preferred_element_type=jnp.float32)
                + bin_ref[...])

            wh = wh_ref[...]                                   # (H, 3H)
            bhn = jnp.broadcast_to(bhn_ref[...], (Bp, H))      # hoisted broadcast
            write_seq = l < num_layers - 1                     # last layer only needs h_T

            def step(t, h, *, _wh=wh, _bhn=bhn, _write_seq=write_seq):
                row = pl.multiple_of(t * Bp, Bp)
                gx = gates_ref[pl.ds(row, Bp), :]              # (Bp, 3H) precomputed x-side
                gh = jnp.dot(h, _wh, preferred_element_type=jnp.float32)
                r = jax.nn.sigmoid(gx[:, 0:H] + gh[:, 0:H])
                z = jax.nn.sigmoid(gx[:, H:2 * H] + gh[:, H:2 * H])
                n = jnp.tanh(gx[:, 2 * H:3 * H] + r * (gh[:, 2 * H:3 * H] + _bhn))
                h_new = n + z * (h - n)                        # == (1-z)*n + z*h
                if _write_seq:
                    seq_ref[pl.ds(row, Bp), :] = h_new
                return h_new

            h_last = lax.fori_loop(0, T, step,
                                   jnp.zeros((Bp, H), jnp.float32),
                                   unroll=True)

        # Linear(H, 1): VPU multiply + lane reduction (no N=1 MXU matmul).
        out_ref[...] = (
            jnp.sum(h_last * fcw_ref[...], axis=-1, keepdims=True) + fcb_ref[...])

    return kernel


# ----------------------------------------------------------------------------
# Parameter packing (done ONCE, outside the forward pass)
# ----------------------------------------------------------------------------
def pack_params(layers, fc_w, fc_b):
    """Convert PyTorch-layout GRU/Linear params to the kernel layout.

    layers: list of (wi (3H,Din), wh (3H,H), bi (3H,), bh (3H,)), gate order r,z,n.
    """
    packed = []
    for (wi, wh, bi, bh) in layers:
        H = wh.shape[1]
        wi_cat = jnp.asarray(wi).T                    # (Din, 3H), columns [r|z|n]
        wh_cat = jnp.asarray(wh).T                    # (H, 3H)
        b_in = jnp.concatenate([bi[0:H] + bh[0:H],
                                bi[H:2 * H] + bh[H:2 * H],
                                bi[2 * H:3 * H]]).reshape(1, 3 * H)
        b_hn = bh[2 * H:3 * H].reshape(1, H)          # must stay inside r*(...)
        packed.append((wi_cat, wh_cat, b_in, b_hn))
    return packed, jnp.asarray(fc_w), jnp.asarray(fc_b).reshape(1, 1)


# ----------------------------------------------------------------------------
# Model forward (equivalent to GRUModel.forward)
# ----------------------------------------------------------------------------
def gru_model_forward(x, packed_layers, fc_w, fc_b2):
    """x: (B, T, Din) float32 batch_first. Returns (B, 1)."""
    B, T, Din = x.shape
    H = packed_layers[0][1].shape[0]
    num_layers = len(packed_layers)
    Bp = _round_up(max(B, _SUBLANE), _SUBLANE)        # pad batch to sublane multiple

    # (B, T, Din) -> (T, Bp, Din) -> (T*Bp, Din): each timestep is one aligned
    # row block of the flattened sequence.
    x_tbd = jnp.transpose(x, (1, 0, 2))
    x_tbd = jnp.pad(x_tbd, ((0, 0), (0, Bp - B), (0, 0)))
    x_flat = x_tbd.reshape(T * Bp, Din)

    vmem = pl.BlockSpec(memory_space=pltpu.MemorySpace.VMEM)
    args = [x_flat]
    in_specs = [vmem]
    for p in packed_layers:
        args.extend(p)
        in_specs.extend([vmem] * 4)
    args.extend([fc_w, fc_b2])
    in_specs.extend([vmem, vmem])

    out_padded = pl.pallas_call(
        _make_fused_gru_kernel(T, Bp, H, num_layers),
        out_shape=jax.ShapeDtypeStruct((Bp, 1), jnp.float32),
        in_specs=in_specs,
        out_specs=vmem,
        scratch_shapes=[
            pltpu.VMEM((T * Bp, 3 * H), jnp.float32),   # hoisted gate projections
            pltpu.VMEM((T * Bp, H), jnp.float32),       # per-layer output sequence
        ],
    )(*args)
    return out_padded[:B]


# ----------------------------------------------------------------------------
# Pure-JAX reference (PyTorch GRU semantics) for validation
# ----------------------------------------------------------------------------
def gru_model_reference(x, layers, fc_w, fc_b):
    B, T, _ = x.shape
    seq = x
    for (wi, wh, bi, bh) in layers:
        H = wh.shape[1]
        h = jnp.zeros((B, H), jnp.float32)
        outs = []
        for t in range(T):
            xt = seq[:, t, :]
            gi = xt @ wi.T + bi
            gh = h @ wh.T + bh
            r = jax.nn.sigmoid(gi[:, 0:H] + gh[:, 0:H])
            z = jax.nn.sigmoid(gi[:, H:2 * H] + gh[:, H:2 * H])
            n = jnp.tanh(gi[:, 2 * H:3 * H] + r * gh[:, 2 * H:3 * H])
            h = (1.0 - z) * n + z * h
            outs.append(h)
        seq = jnp.stack(outs, axis=1)
    return seq[:, -1, :] @ fc_w.T + fc_b


# ----------------------------------------------------------------------------
# Parameter init (PyTorch layout, uniform(-1/sqrt(H), 1/sqrt(H)))
# ----------------------------------------------------------------------------
def init_params(key, input_size, hidden_size, num_layers):
    scale = 1.0 / math.sqrt(hidden_size)
    layers = []
    for layer in range(num_layers):
        in_sz = input_size if layer == 0 else hidden_size
        key, k1, k2, k3, k4 = jax.random.split(key, 5)
        wi = jax.random.uniform(k1, (3 * hidden_size, in_sz), jnp.float32, -scale, scale)
        wh = jax.random.uniform(k2, (3 * hidden_size, hidden_size), jnp.float32, -scale, scale)
        bi = jax.random.uniform(k3, (3 * hidden_size,), jnp.float32, -scale, scale)
        bh = jax.random.uniform(k4, (3 * hidden_size,), jnp.float32, -scale, scale)
        layers.append((wi, wh, bi, bh))
    key, k1, k2 = jax.random.split(key, 3)
    fc_w = jax.random.uniform(k1, (1, hidden_size), jnp.float32, -scale, scale)
    fc_b = jax.random.uniform(k2, (1,), jnp.float32, -scale, scale)
    return layers, fc_w, fc_b


if __name__ == "__main__":
    B, T, INPUT_SIZE, HIDDEN_SIZE, NUM_LAYERS = 2, 8, 4, 32, 2

    key = jax.random.PRNGKey(0)
    key, pkey, xkey = jax.random.split(key, 3)
    layers, fc_w, fc_b = init_params(pkey, INPUT_SIZE, HIDDEN_SIZE, NUM_LAYERS)
    packed_layers, fc_w_p, fc_b_p = pack_params(layers, fc_w, fc_b)  # packed once

    x = jax.random.normal(xkey, (B, T, INPUT_SIZE), jnp.float32)

    fwd = jax.jit(gru_model_forward)
    out = fwd(x, packed_layers, fc_w_p, fc_b_p)
    out = jax.block_until_ready(out)

    assert out.shape == (B, 1), out.shape
    assert bool(jnp.all(jnp.isfinite(out)))

    # Validate against a pure-JAX reference. Loose tolerance accounts for TPU
    # default-precision (bf16-pass) f32 matmuls on both paths.
    ref = gru_model_reference(x, layers, fc_w, fc_b)
    assert jnp.allclose(out, ref, atol=2e-2, rtol=2e-2), (out, ref)

    print("KERNEL_OK")
</pallas_src>

<mosaic_0001>
module attributes {stable_mosaic.version = 11 : i64} {
  func.func @kernel(%arg0: memref<64x4xf32, #tpu.memory_space<vmem>>, %arg1: memref<4x96xf32, #tpu.memory_space<vmem>>, %arg2: memref<32x96xf32, #tpu.memory_space<vmem>>, %arg3: memref<1x96xf32, #tpu.memory_space<vmem>>, %arg4: memref<1x32xf32, #tpu.memory_space<vmem>>, %arg5: memref<32x96xf32, #tpu.memory_space<vmem>>, %arg6: memref<32x96xf32, #tpu.memory_space<vmem>>, %arg7: memref<1x96xf32, #tpu.memory_space<vmem>>, %arg8: memref<1x32xf32, #tpu.memory_space<vmem>>, %arg9: memref<1x32xf32, #tpu.memory_space<vmem>>, %arg10: memref<1x1xf32, #tpu.memory_space<vmem>>, %arg11: memref<8x1xf32, #tpu.memory_space<vmem>>, %arg12: memref<64x96xf32, #tpu.memory_space<vmem>>, %arg13: memref<64x32xf32, #tpu.memory_space<vmem>>) attributes {dimension_semantics = [], scalar_prefetch = 0 : i64, scratch_operands = 2 : i64, tpu.core_type = #tpu.core_type<tc>} {
    %c0 = arith.constant 0 : index
    %c0_0 = arith.constant 0 : index
    %0 = vector.load %arg0[%c0, %c0_0] : memref<64x4xf32, #tpu.memory_space<vmem>>, vector<64x4xf32>
    %c0_1 = arith.constant 0 : index
    %c0_2 = arith.constant 0 : index
    %1 = vector.load %arg1[%c0_1, %c0_2] : memref<4x96xf32, #tpu.memory_space<vmem>>, vector<4x96xf32>
    %cst = arith.constant dense<0.000000e+00> : vector<64x96xf32>
    %2 = tpu.matmul %0, %1, %cst {dimension_numbers = #tpu.dot_dimension_numbers<[1], [0], [0], [1], [0, 0, 1, 1], [], []>} : vector<64x4xf32>, vector<4x96xf32>, vector<64x96xf32> -> vector<64x96xf32>
    %c0_3 = arith.constant 0 : index
    %c0_4 = arith.constant 0 : index
    %3 = vector.load %arg3[%c0_3, %c0_4] : memref<1x96xf32, #tpu.memory_space<vmem>>, vector<1x96xf32>
    %4 = vector.broadcast %3 : vector<1x96xf32> to vector<64x96xf32>
    %5 = arith.addf %2, %4 : vector<64x96xf32>
    %c0_5 = arith.constant 0 : index
    %c0_6 = arith.constant 0 : index
    %6 = vector.load %arg12[%c0_5, %c0_6] : memref<64x96xf32, #tpu.memory_space<vmem>>, vector<64x96xf32>
    tpu.vector_store %arg12[%c0_5, %c0_6], %5 {strides = array<i32>} : memref<64x96xf32, #tpu.memory_space<vmem>>, vector<64x96xf32>,
    %c0_7 = arith.constant 0 : index
    %c0_8 = arith.constant 0 : index
    %7 = vector.load %arg2[%c0_7, %c0_8] : memref<32x96xf32, #tpu.memory_space<vmem>>, vector<32x96xf32>
    %c0_9 = arith.constant 0 : index
    %c0_10 = arith.constant 0 : index
    %8 = vector.load %arg4[%c0_9, %c0_10] : memref<1x32xf32, #tpu.memory_space<vmem>>, vector<1x32xf32>
    %9 = vector.shape_cast %8 : vector<1x32xf32> to vector<1x32xf32>
    %10 = vector.broadcast %9 : vector<1x32xf32> to vector<8x32xf32>
    %cst_11 = arith.constant 0.000000e+00 : f32
    %11 = vector.broadcast %cst_11 : f32 to vector<8x32xf32>
    %c0_i32 = arith.constant 0 : i32
    %c8_i32 = arith.constant 8 : i32
    %12 = arith.muli %c0_i32, %c8_i32 : i32
    %13 = tpu.assume_multiple %12, 8 : i32
    %14 = arith.index_cast %13 : i32 to index
    %c0_12 = arith.constant 0 : index
    %15 = vector.load %arg12[%14, %c0_12] : memref<64x96xf32, #tpu.memory_space<vmem>>, vector<8x96xf32>
    %cst_13 = arith.constant dense<0.000000e+00> : vector<8x96xf32>
    %16 = tpu.matmul %11, %7, %cst_13 {dimension_numbers = #tpu.dot_dimension_numbers<[1], [0], [0], [1], [0, 0, 1, 1], [], []>} : vector<8x32xf32>, vector<32x96xf32>, vector<8x96xf32> -> vector<8x96xf32>
    %17 = vector.extract_strided_slice %15 {offsets = [0, 0], sizes = [8, 32], strides = [1, 1]} : vector<8x96xf32> to vector<8x32xf32>
    %18 = vector.extract_strided_slice %16 {offsets = [0, 0], sizes = [8, 32], strides = [1, 1]} : vector<8x96xf32> to vector<8x32xf32>
    %19 = arith.addf %17, %18 : vector<8x32xf32>
    %20 = arith.negf %19 : vector<8x32xf32>
    %21 = math.exp %20 : vector<8x32xf32>
    %cst_14 = arith.constant 1.000000e+00 : f32
    %22 = vector.broadcast %cst_14 : f32 to vector<8x32xf32>
    %23 = arith.addf %22, %21 : vector<8x32xf32>
    %24 = arith.divf %22, %23 : vector<8x32xf32>
    %25 = vector.extract_strided_slice %15 {offsets = [0, 32], sizes = [8, 32], strides = [1, 1]} : vector<8x96xf32> to vector<8x32xf32>
    %26 = vector.extract_strided_slice %16 {offsets = [0, 32], sizes = [8, 32], strides = [1, 1]} : vector<8x96xf32> to vector<8x32xf32>
    %27 = arith.addf %25, %26 : vector<8x32xf32>
    %28 = arith.negf %27 : vector<8x32xf32>
    %29 = math.exp %28 : vector<8x32xf32>
    %cst_15 = arith.constant 1.000000e+00 : f32
    %30 = vector.broadcast %cst_15 : f32 to vector<8x32xf32>
    %31 = arith.addf %30, %29 : vector<8x32xf32>
    %32 = arith.divf %30, %31 : vector<8x32xf32>
    %33 = vector.extract_strided_slice %15 {offsets = [0, 64], sizes = [8, 32], strides = [1, 1]} : vector<8x96xf32> to vector<8x32xf32>
    %34 = vector.extract_strided_slice %16 {offsets = [0, 64], sizes = [8, 32], strides = [1, 1]} : vector<8x96xf32> to vector<8x32xf32>
    %35 = arith.addf %34, %10 : vector<8x32xf32>
    %36 = arith.mulf %24, %35 : vector<8x32xf32>
    %37 = arith.addf %33, %36 : vector<8x32xf32>
    %38 = math.tanh %37 : vector<8x32xf32>
    %39 = arith.subf %11, %38 : vector<8x32xf32>
    %40 = arith.mulf %32, %39 : vector<8x32xf32>
    %41 = arith.addf %38, %40 : vector<8x32xf32>
    %42 = arith.index_cast %13 : i32 to index
    %c0_16 = arith.constant 0 : index
    %43 = vector.load %arg13[%42, %c0_16] : memref<64x32xf32, #tpu.memory_space<vmem>>, vector<8x32xf32>
    tpu.vector_store %arg13[%42, %c0_16], %41 {strides = array<i32>} : memref<64x32xf32, #tpu.memory_space<vmem>>, vector<8x32xf32>,
    %c1_i32 = arith.constant 1 : i32
    %c8_i32_17 = arith.constant 8 : i32
    %44 = arith.muli %c1_i32, %c8_i32_17 : i32
    %45 = tpu.assume_multiple %44, 8 : i32
    %46 = arith.index_cast %45 : i32 to index
    %c0_18 = arith.constant 0 : index
    %47 = vector.load %arg12[%46, %c0_18] : memref<64x96xf32, #tpu.memory_space<vmem>>, vector<8x96xf32>
    %cst_19 = arith.constant dense<0.000000e+00> : vector<8x96xf32>
    %48 = tpu.matmul %41, %7, %cst_19 {dimension_numbers = #tpu.dot_dimension_numbers<[1], [0], [0], [1], [0, 0, 1, 1], [], []>} : vector<8x32xf32>, vector<32x96xf32>, vector<8x96xf32> -> vector<8x96xf32>
    %49 = vector.extract_strided_slice %47 {offsets = [0, 0], sizes = [8, 32], strides = [1, 1]} : vector<8x96xf32> to vector<8x32xf32>
    %50 = vector.extract_strided_slice %48 {offsets = [0, 0], sizes = [8, 32], strides = [1, 1]} : vector<8x96xf32> to vector<8x32xf32>
    %51 = arith.addf %49, %50 : vector<8x32xf32>
    %52 = arith.negf %51 : vector<8x32xf32>
    %53 = math.exp %52 : vector<8x32xf32>
    %cst_20 = arith.constant 1.000000e+00 : f32
    %54 = vector.broadcast %cst_20 : f32 to vector<8x32xf32>
    %55 = arith.addf %54, %53 : vector<8x32xf32>
    %56 = arith.divf %54, %55 : vector<8x32xf32>
    %57 = vector.extract_strided_slice %47 {offsets = [0, 32], sizes = [8, 32], strides = [1, 1]} : vector<8x96xf32> to vector<8x32xf32>
    %58 = vector.extract_strided_slice %48 {offsets = [0, 32], sizes = [8, 32], strides = [1, 1]} : vector<8x96xf32> to vector<8x32xf32>
    %59 = arith.addf %57, %58 : vector<8x32xf32>
    %60 = arith.negf %59 : vector<8x32xf32>
    %61 = math.exp %60 : vector<8x32xf32>
    %cst_21 = arith.constant 1.000000e+00 : f32
    %62 = vector.broadcast %cst_21 : f32 to vector<8x32xf32>
    %63 = arith.addf %62, %61 : vector<8x32xf32>
    %64 = arith.divf %62, %63 : vector<8x32xf32>
    %65 = vector.extract_strided_slice %47 {offsets = [0, 64], sizes = [8, 32], strides = [1, 1]} : vector<8x96xf32> to vector<8x32xf32>
    %66 = vector.extract_strided_slice %48 {offsets = [0, 64], sizes = [8, 32], strides = [1, 1]} : vector<8x96xf32> to vector<8x32xf32>
    %67 = arith.addf %66, %10 : vector<8x32xf32>
    %68 = arith.mulf %56, %67 : vector<8x32xf32>
    %69 = arith.addf %65, %68 : vector<8x32xf32>
    %70 = math.tanh %69 : vector<8x32xf32>
    %71 = arith.subf %41, %70 : vector<8x32xf32>
    %72 = arith.mulf %64, %71 : vector<8x32xf32>
    %73 = arith.addf %70, %72 : vector<8x32xf32>
    %74 = arith.index_cast %45 : i32 to index
    %c0_22 = arith.constant 0 : index
    %75 = vector.load %arg13[%74, %c0_22] : memref<64x32xf32, #tpu.memory_space<vmem>>, vector<8x32xf32>
    tpu.vector_store %arg13[%74, %c0_22], %73 {strides = array<i32>} : memref<64x32xf32, #tpu.memory_space<vmem>>, vector<8x32xf32>,
    %c2_i32 = arith.constant 2 : i32
    %c8_i32_23 = arith.constant 8 : i32
    %76 = arith.muli %c2_i32, %c8_i32_23 : i32
    %77 = tpu.assume_multiple %76, 8 : i32
    %78 = arith.index_cast %77 : i32 to index
    %c0_24 = arith.constant 0 : index
    %79 = vector.load %arg12[%78, %c0_24] : memref<64x96xf32, #tpu.memory_space<vmem>>, vector<8x96xf32>
    %cst_25 = arith.constant dense<0.000000e+00> : vector<8x96xf32>
    %80 = tpu.matmul %73, %7, %cst_25 {dimension_numbers = #tpu.dot_dimension_numbers<[1], [0], [0], [1], [0, 0, 1, 1], [], []>} : vector<8x32xf32>, vector<32x96xf32>, vector<8x96xf32> -> vector<8x96xf32>
    %81 = vector.extract_strided_slice %79 {offsets = [0, 0], sizes = [8, 32], strides = [1, 1]} : vector<8x96xf32> to vector<8x32xf32>
    %82 = vector.extract_strided_slice %80 {offsets = [0, 0], sizes = [8, 32], strides = [1, 1]} : vector<8x96xf32> to vector<8x32xf32>
    %83 = arith.addf %81, %82 : vector<8x32xf32>
    %84 = arith.negf %83 : vector<8x32xf32>
    %85 = math.exp %84 : vector<8x32xf32>
    %cst_26 = arith.constant 1.000000e+00 : f32
    %86 = vector.broadcast %cst_26 : f32 to vector<8x32xf32>
    %87 = arith.addf %86, %85 : vector<8x32xf32>
    %88 = arith.divf %86, %87 : vector<8x32xf32>
    %89 = vector.extract_strided_slice %79 {offsets = [0, 32], sizes = [8, 32], strides = [1, 1]} : vector<8x96xf32> to vector<8x32xf32>
    %90 = vector.extract_strided_slice %80 {offsets = [0, 32], sizes = [8, 32], strides = [1, 1]} : vector<8x96xf32> to vector<8x32xf32>
    %91 = arith.addf %89, %90 : vector<8x32xf32>
    %92 = arith.negf %91 : vector<8x32xf32>
    %93 = math.exp %92 : vector<8x32xf32>
    %cst_27 = arith.constant 1.000000e+00 : f32
    %94 = vector.broadcast %cst_27 : f32 to vector<8x32xf32>
    %95 = arith.addf %94, %93 : vector<8x32xf32>
    %96 = arith.divf %94, %95 : vector<8x32xf32>
    %97 = vector.extract_strided_slice %79 {offsets = [0, 64], sizes = [8, 32], strides = [1, 1]} : vector<8x96xf32> to vector<8x32xf32>
    %98 = vector.extract_strided_slice %80 {offsets = [0, 64], sizes = [8, 32], strides = [1, 1]} : vector<8x96xf32> to vector<8x32xf32>
    %99 = arith.addf %98, %10 : vector<8x32xf32>
    %100 = arith.mulf %88, %99 : vector<8x32xf32>
    %101 = arith.addf %97, %100 : vector<8x32xf32>
    %102 = math.tanh %101 : vector<8x32xf32>
    %103 = arith.subf %73, %102 : vector<8x32xf32>
    %104 = arith.mulf %96, %103 : vector<8x32xf32>
    %105 = arith.addf %102, %104 : vector<8x32xf32>
    %106 = arith.index_cast %77 : i32 to index
    %c0_28 = arith.constant 0 : index
    %107 = vector.load %arg13[%106, %c0_28] : memref<64x32xf32, #tpu.memory_space<vmem>>, vector<8x32xf32>
    tpu.vector_store %arg13[%106, %c0_28], %105 {strides = array<i32>} : memref<64x32xf32, #tpu.memory_space<vmem>>, vector<8x32xf32>,
    %c3_i32 = arith.constant 3 : i32
    %c8_i32_29 = arith.constant 8 : i32
    %108 = arith.muli %c3_i32, %c8_i32_29 : i32
    %109 = tpu.assume_multiple %108, 8 : i32
    %110 = arith.index_cast %109 : i32 to index
    %c0_30 = arith.constant 0 : index
    %111 = vector.load %arg12[%110, %c0_30] : memref<64x96xf32, #tpu.memory_space<vmem>>, vector<8x96xf32>
    %cst_31 = arith.constant dense<0.000000e+00> : vector<8x96xf32>
    %112 = tpu.matmul %105, %7, %cst_31 {dimension_numbers = #tpu.dot_dimension_numbers<[1], [0], [0], [1], [0, 0, 1, 1], [], []>} : vector<8x32xf32>, vector<32x96xf32>, vector<8x96xf32> -> vector<8x96xf32>
    %113 = vector.extract_strided_slice %111 {offsets = [0, 0], sizes = [8, 32], strides = [1, 1]} : vector<8x96xf32> to vector<8x32xf32>
    %114 = vector.extract_strided_slice %112 {offsets = [0, 0], sizes = [8, 32], strides = [1, 1]} : vector<8x96xf32> to vector<8x32xf32>
    %115 = arith.addf %113, %114 : vector<8x32xf32>
    %116 = arith.negf %115 : vector<8x32xf32>
    %117 = math.exp %116 : vector<8x32xf32>
    %cst_32 = arith.constant 1.000000e+00 : f32
    %118 = vector.broadcast %cst_32 : f32 to vector<8x32xf32>
    %119 = arith.addf %118, %117 : vector<8x32xf32>
    %120 = arith.divf %118, %119 : vector<8x32xf32>
    %121 = vector.extract_strided_slice %111 {offsets = [0, 32], sizes = [8, 32], strides = [1, 1]} : vector<8x96xf32> to vector<8x32xf32>
    %122 = vector.extract_strided_slice %112 {offsets = [0, 32], sizes = [8, 32], strides = [1, 1]} : vector<8x96xf32> to vector<8x32xf32>
    %123 = arith.addf %121, %122 : vector<8x32xf32>
    %124 = arith.negf %123 : vector<8x32xf32>
    %125 = math.exp %124 : vector<8x32xf32>
    %cst_33 = arith.constant 1.000000e+00 : f32
    %126 = vector.broadcast %cst_33 : f32 to vector<8x32xf32>
    %127 = arith.addf %126, %125 : vector<8x32xf32>
    %128 = arith.divf %126, %127 : vector<8x32xf32>
    %129 = vector.extract_strided_slice %111 {offsets = [0, 64], sizes = [8, 32], strides = [1, 1]} : vector<8x96xf32> to vector<8x32xf32>
    %130 = vector.extract_strided_slice %112 {offsets = [0, 64], sizes = [8, 32], strides = [1, 1]} : vector<8x96xf32> to vector<8x32xf32>
    %131 = arith.addf %130, %10 : vector<8x32xf32>
    %132 = arith.mulf %120, %131 : vector<8x32xf32>
    %133 = arith.addf %129, %132 : vector<8x32xf32>
    %134 = math.tanh %133 : vector<8x32xf32>
    %135 = arith.subf %105, %134 : vector<8x32xf32>
    %136 = arith.mulf %128, %135 : vector<8x32xf32>
    %137 = arith.addf %134, %136 : vector<8x32xf32>
    %138 = arith.index_cast %109 : i32 to index
    %c0_34 = arith.constant 0 : index
    %139 = vector.load %arg13[%138, %c0_34] : memref<64x32xf32, #tpu.memory_space<vmem>>, vector<8x32xf32>
    tpu.vector_store %arg13[%138, %c0_34], %137 {strides = array<i32>} : memref<64x32xf32, #tpu.memory_space<vmem>>, vector<8x32xf32>,
    %c4_i32 = arith.constant 4 : i32
    %c8_i32_35 = arith.constant 8 : i32
    %140 = arith.muli %c4_i32, %c8_i32_35 : i32
    %141 = tpu.assume_multiple %140, 8 : i32
    %142 = arith.index_cast %141 : i32 to index
    %c0_36 = arith.constant 0 : index
    %143 = vector.load %arg12[%142, %c0_36] : memref<64x96xf32, #tpu.memory_space<vmem>>, vector<8x96xf32>
    %cst_37 = arith.constant dense<0.000000e+00> : vector<8x96xf32>
    %144 = tpu.matmul %137, %7, %cst_37 {dimension_numbers = #tpu.dot_dimension_numbers<[1], [0], [0], [1], [0, 0, 1, 1], [], []>} : vector<8x32xf32>, vector<32x96xf32>, vector<8x96xf32> -> vector<8x96xf32>
    %145 = vector.extract_strided_slice %143 {offsets = [0, 0], sizes = [8, 32], strides = [1, 1]} : vector<8x96xf32> to vector<8x32xf32>
    %146 = vector.extract_strided_slice %144 {offsets = [0, 0], sizes = [8, 32], strides = [1, 1]} : vector<8x96xf32> to vector<8x32xf32>
    %147 = arith.addf %145, %146 : vector<8x32xf32>
    %148 = arith.negf %147 : vector<8x32xf32>
    %149 = math.exp %148 : vector<8x32xf32>
    %cst_38 = arith.constant 1.000000e+00 : f32
    %150 = vector.broadcast %cst_38 : f32 to vector<8x32xf32>
    %151 = arith.addf %150, %149 : vector<8x32xf32>
    %152 = arith.divf %150, %151 : vector<8x32xf32>
    %153 = vector.extract_strided_slice %143 {offsets = [0, 32], sizes = [8, 32], strides = [1, 1]} : vector<8x96xf32> to vector<8x32xf32>
    %154 = vector.extract_strided_slice %144 {offsets = [0, 32], sizes = [8, 32], strides = [1, 1]} : vector<8x96xf32> to vector<8x32xf32>
    %155 = arith.addf %153, %154 : vector<8x32xf32>
    %156 = arith.negf %155 : vector<8x32xf32>
    %157 = math.exp %156 : vector<8x32xf32>
    %cst_39 = arith.constant 1.000000e+00 : f32
    %158 = vector.broadcast %cst_39 : f32 to vector<8x32xf32>
    %159 = arith.addf %158, %157 : vector<8x32xf32>
    %160 = arith.divf %158, %159 : vector<8x32xf32>
    %161 = vector.extract_strided_slice %143 {offsets = [0, 64], sizes = [8, 32], strides = [1, 1]} : vector<8x96xf32> to vector<8x32xf32>
    %162 = vector.extract_strided_slice %144 {offsets = [0, 64], sizes = [8, 32], strides = [1, 1]} : vector<8x96xf32> to vector<8x32xf32>
    %163 = arith.addf %162, %10 : vector<8x32xf32>
    %164 = arith.mulf %152, %163 : vector<8x32xf32>
    %165 = arith.addf %161, %164 : vector<8x32xf32>
    %166 = math.tanh %165 : vector<8x32xf32>
    %167 = arith.subf %137, %166 : vector<8x32xf32>
    %168 = arith.mulf %160, %167 : vector<8x32xf32>
    %169 = arith.addf %166, %168 : vector<8x32xf32>
    %170 = arith.index_cast %141 : i32 to index
    %c0_40 = arith.constant 0 : index
    %171 = vector.load %arg13[%170, %c0_40] : memref<64x32xf32, #tpu.memory_space<vmem>>, vector<8x32xf32>
    tpu.vector_store %arg13[%170, %c0_40], %169 {strides = array<i32>} : memref<64x32xf32, #tpu.memory_space<vmem>>, vector<8x32xf32>,
    %c5_i32 = arith.constant 5 : i32
    %c8_i32_41 = arith.constant 8 : i32
    %172 = arith.muli %c5_i32, %c8_i32_41 : i32
    %173 = tpu.assume_multiple %172, 8 : i32
    %174 = arith.index_cast %173 : i32 to index
    %c0_42 = arith.constant 0 : index
    %175 = vector.load %arg12[%174, %c0_42] : memref<64x96xf32, #tpu.memory_space<vmem>>, vector<8x96xf32>
    %cst_43 = arith.constant dense<0.000000e+00> : vector<8x96xf32>
    %176 = tpu.matmul %169, %7, %cst_43 {dimension_numbers = #tpu.dot_dimension_numbers<[1], [0], [0], [1], [0, 0, 1, 1], [], []>} : vector<8x32xf32>, vector<32x96xf32>, vector<8x96xf32> -> vector<8x96xf32>
    %177 = vector.extract_strided_slice %175 {offsets = [0, 0], sizes = [8, 32], strides = [1, 1]} : vector<8x96xf32> to vector<8x32xf32>
    %178 = vector.extract_strided_slice %176 {offsets = [0, 0], sizes = [8, 32], strides = [1, 1]} : vector<8x96xf32> to vector<8x32xf32>
    %179 = arith.addf %177, %178 : vector<8x32xf32>
    %180 = arith.negf %179 : vector<8x32xf32>
    %181 = math.exp %180 : vector<8x32xf32>
    %cst_44 = arith.constant 1.000000e+00 : f32
    %182 = vector.broadcast %cst_44 : f32 to vector<8x32xf32>
    %183 = arith.addf %182, %181 : vector<8x32xf32>
    %184 = arith.divf %182, %183 : vector<8x32xf32>
    %185 = vector.extract_strided_slice %175 {offsets = [0, 32], sizes = [8, 32], strides = [1, 1]} : vector<8x96xf32> to vector<8x32xf32>
    %186 = vector.extract_strided_slice %176 {offsets = [0, 32], sizes = [8, 32], strides = [1, 1]} : vector<8x96xf32> to vector<8x32xf32>
    %187 = arith.addf %185, %186 : vector<8x32xf32>
    %188 = arith.negf %187 : vector<8x32xf32>
    %189 = math.exp %188 : vector<8x32xf32>
    %cst_45 = arith.constant 1.000000e+00 : f32
    %190 = vector.broadcast %cst_45 : f32 to vector<8x32xf32>
    %191 = arith.addf %190, %189 : vector<8x32xf32>
    %192 = arith.divf %190, %191 : vector<8x32xf32>
    %193 = vector.extract_strided_slice %175 {offsets = [0, 64], sizes = [8, 32], strides = [1, 1]} : vector<8x96xf32> to vector<8x32xf32>
    %194 = vector.extract_strided_slice %176 {offsets = [0, 64], sizes = [8, 32], strides = [1, 1]} : vector<8x96xf32> to vector<8x32xf32>
    %195 = arith.addf %194, %10 : vector<8x32xf32>
    %196 = arith.mulf %184, %195 : vector<8x32xf32>
    %197 = arith.addf %193, %196 : vector<8x32xf32>
    %198 = math.tanh %197 : vector<8x32xf32>
    %199 = arith.subf %169, %198 : vector<8x32xf32>
    %200 = arith.mulf %192, %199 : vector<8x32xf32>
    %201 = arith.addf %198, %200 : vector<8x32xf32>
    %202 = arith.index_cast %173 : i32 to index
    %c0_46 = arith.constant 0 : index
    %203 = vector.load %arg13[%202, %c0_46] : memref<64x32xf32, #tpu.memory_space<vmem>>, vector<8x32xf32>
    tpu.vector_store %arg13[%202, %c0_46], %201 {strides = array<i32>} : memref<64x32xf32, #tpu.memory_space<vmem>>, vector<8x32xf32>,
    %c6_i32 = arith.constant 6 : i32
    %c8_i32_47 = arith.constant 8 : i32
    %204 = arith.muli %c6_i32, %c8_i32_47 : i32
    %205 = tpu.assume_multiple %204, 8 : i32
    %206 = arith.index_cast %205 : i32 to index
    %c0_48 = arith.constant 0 : index
    %207 = vector.load %arg12[%206, %c0_48] : memref<64x96xf32, #tpu.memory_space<vmem>>, vector<8x96xf32>
    %cst_49 = arith.constant dense<0.000000e+00> : vector<8x96xf32>
    %208 = tpu.matmul %201, %7, %cst_49 {dimension_numbers = #tpu.dot_dimension_numbers<[1], [0], [0], [1], [0, 0, 1, 1], [], []>} : vector<8x32xf32>, vector<32x96xf32>, vector<8x96xf32> -> vector<8x96xf32>
    %209 = vector.extract_strided_slice %207 {offsets = [0, 0], sizes = [8, 32], strides = [1, 1]} : vector<8x96xf32> to vector<8x32xf32>
    %210 = vector.extract_strided_slice %208 {offsets = [0, 0], sizes = [8, 32], strides = [1, 1]} : vector<8x96xf32> to vector<8x32xf32>
    %211 = arith.addf %209, %210 : vector<8x32xf32>
    %212 = arith.negf %211 : vector<8x32xf32>
    %213 = math.exp %212 : vector<8x32xf32>
    %cst_50 = arith.constant 1.000000e+00 : f32
    %214 = vector.broadcast %cst_50 : f32 to vector<8x32xf32>
    %215 = arith.addf %214, %213 : vector<8x32xf32>
    %216 = arith.divf %214, %215 : vector<8x32xf32>
    %217 = vector.extract_strided_slice %207 {offsets = [0, 32], sizes = [8, 32], strides = [1, 1]} : vector<8x96xf32> to vector<8x32xf32>
    %218 = vector.extract_strided_slice %208 {offsets = [0, 32], sizes = [8, 32], strides = [1, 1]} : vector<8x96xf32> to vector<8x32xf32>
    %219 = arith.addf %217, %218 : vector<8x32xf32>
    %220 = arith.negf %219 : vector<8x32xf32>
    %221 = math.exp %220 : vector<8x32xf32>
    %cst_51 = arith.constant 1.000000e+00 : f32
    %222 = vector.broadcast %cst_51 : f32 to vector<8x32xf32>
    %223 = arith.addf %222, %221 : vector<8x32xf32>
    %224 = arith.divf %222, %223 : vector<8x32xf32>
    %225 = vector.extract_strided_slice %207 {offsets = [0, 64], sizes = [8, 32], strides = [1, 1]} : vector<8x96xf32> to vector<8x32xf32>
    %226 = vector.extract_strided_slice %208 {offsets = [0, 64], sizes = [8, 32], strides = [1, 1]} : vector<8x96xf32> to vector<8x32xf32>
    %227 = arith.addf %226, %10 : vector<8x32xf32>
    %228 = arith.mulf %216, %227 : vector<8x32xf32>
    %229 = arith.addf %225, %228 : vector<8x32xf32>
    %230 = math.tanh %229 : vector<8x32xf32>
    %231 = arith.subf %201, %230 : vector<8x32xf32>
    %232 = arith.mulf %224, %231 : vector<8x32xf32>
    %233 = arith.addf %230, %232 : vector<8x32xf32>
    %234 = arith.index_cast %205 : i32 to index
    %c0_52 = arith.constant 0 : index
    %235 = vector.load %arg13[%234, %c0_52] : memref<64x32xf32, #tpu.memory_space<vmem>>, vector<8x32xf32>
    tpu.vector_store %arg13[%234, %c0_52], %233 {strides = array<i32>} : memref<64x32xf32, #tpu.memory_space<vmem>>, vector<8x32xf32>,
    %c7_i32 = arith.constant 7 : i32
    %c8_i32_53 = arith.constant 8 : i32
    %236 = arith.muli %c7_i32, %c8_i32_53 : i32
    %237 = tpu.assume_multiple %236, 8 : i32
    %238 = arith.index_cast %237 : i32 to index
    %c0_54 = arith.constant 0 : index
    %239 = vector.load %arg12[%238, %c0_54] : memref<64x96xf32, #tpu.memory_space<vmem>>, vector<8x96xf32>
    %cst_55 = arith.constant dense<0.000000e+00> : vector<8x96xf32>
    %240 = tpu.matmul %233, %7, %cst_55 {dimension_numbers = #tpu.dot_dimension_numbers<[1], [0], [0], [1], [0, 0, 1, 1], [], []>} : vector<8x32xf32>, vector<32x96xf32>, vector<8x96xf32> -> vector<8x96xf32>
    %241 = vector.extract_strided_slice %239 {offsets = [0, 0], sizes = [8, 32], strides = [1, 1]} : vector<8x96xf32> to vector<8x32xf32>
    %242 = vector.extract_strided_slice %240 {offsets = [0, 0], sizes = [8, 32], strides = [1, 1]} : vector<8x96xf32> to vector<8x32xf32>
    %243 = arith.addf %241, %242 : vector<8x32xf32>
    %244 = arith.negf %243 : vector<8x32xf32>
    %245 = math.exp %244 : vector<8x32xf32>
    %cst_56 = arith.constant 1.000000e+00 : f32
    %246 = vector.broadcast %cst_56 : f32 to vector<8x32xf32>
    %247 = arith.addf %246, %245 : vector<8x32xf32>
    %248 = arith.divf %246, %247 : vector<8x32xf32>
    %249 = vector.extract_strided_slice %239 {offsets = [0, 32], sizes = [8, 32], strides = [1, 1]} : vector<8x96xf32> to vector<8x32xf32>
    %250 = vector.extract_strided_slice %240 {offsets = [0, 32], sizes = [8, 32], strides = [1, 1]} : vector<8x96xf32> to vector<8x32xf32>
    %251 = arith.addf %249, %250 : vector<8x32xf32>
    %252 = arith.negf %251 : vector<8x32xf32>
    %253 = math.exp %252 : vector<8x32xf32>
    %cst_57 = arith.constant 1.000000e+00 : f32
    %254 = vector.broadcast %cst_57 : f32 to vector<8x32xf32>
    %255 = arith.addf %254, %253 : vector<8x32xf32>
    %256 = arith.divf %254, %255 : vector<8x32xf32>
    %257 = vector.extract_strided_slice %239 {offsets = [0, 64], sizes = [8, 32], strides = [1, 1]} : vector<8x96xf32> to vector<8x32xf32>
    %258 = vector.extract_strided_slice %240 {offsets = [0, 64], sizes = [8, 32], strides = [1, 1]} : vector<8x96xf32> to vector<8x32xf32>
    %259 = arith.addf %258, %10 : vector<8x32xf32>
    %260 = arith.mulf %248, %259 : vector<8x32xf32>
    %261 = arith.addf %257, %260 : vector<8x32xf32>
    %262 = math.tanh %261 : vector<8x32xf32>
    %263 = arith.subf %233, %262 : vector<8x32xf32>
    %264 = arith.mulf %256, %263 : vector<8x32xf32>
    %265 = arith.addf %262, %264 : vector<8x32xf32>
    %266 = arith.index_cast %237 : i32 to index
    %c0_58 = arith.constant 0 : index
    %267 = vector.load %arg13[%266, %c0_58] : memref<64x32xf32, #tpu.memory_space<vmem>>, vector<8x32xf32>
    tpu.vector_store %arg13[%266, %c0_58], %265 {strides = array<i32>} : memref<64x32xf32, #tpu.memory_space<vmem>>, vector<8x32xf32>,
    %c8_i32_59 = arith.constant 8 : i32
    %c0_60 = arith.constant 0 : index
    %c0_61 = arith.constant 0 : index
    %268 = vector.load %arg13[%c0_60, %c0_61] : memref<64x32xf32, #tpu.memory_space<vmem>>, vector<64x32xf32>
    %c0_62 = arith.constant 0 : index
    %c0_63 = arith.constant 0 : index
    %269 = vector.load %arg5[%c0_62, %c0_63] : memref<32x96xf32, #tpu.memory_space<vmem>>, vector<32x96xf32>
    %cst_64 = arith.constant dense<0.000000e+00> : vector<64x96xf32>
    %270 = tpu.matmul %268, %269, %cst_64 {dimension_numbers = #tpu.dot_dimension_numbers<[1], [0], [0], [1], [0, 0, 1, 1], [], []>} : vector<64x32xf32>, vector<32x96xf32>, vector<64x96xf32> -> vector<64x96xf32>
    %c0_65 = arith.constant 0 : index
    %c0_66 = arith.constant 0 : index
    %271 = vector.load %arg7[%c0_65, %c0_66] : memref<1x96xf32, #tpu.memory_space<vmem>>, vector<1x96xf32>
    %272 = vector.broadcast %271 : vector<1x96xf32> to vector<64x96xf32>
    %273 = arith.addf %270, %272 : vector<64x96xf32>
    %c0_67 = arith.constant 0 : index
    %c0_68 = arith.constant 0 : index
    %274 = vector.load %arg12[%c0_67, %c0_68] : memref<64x96xf32, #tpu.memory_space<vmem>>, vector<64x96xf32>
    tpu.vector_store %arg12[%c0_67, %c0_68], %273 {strides = array<i32>} : memref<64x96xf32, #tpu.memory_space<vmem>>, vector<64x96xf32>,
    %c0_69 = arith.constant 0 : index
    %c0_70 = arith.constant 0 : index
    %275 = vector.load %arg6[%c0_69, %c0_70] : memref<32x96xf32, #tpu.memory_space<vmem>>, vector<32x96xf32>
    %c0_71 = arith.constant 0 : index
    %c0_72 = arith.constant 0 : index
    %276 = vector.load %arg8[%c0_71, %c0_72] : memref<1x32xf32, #tpu.memory_space<vmem>>, vector<1x32xf32>
    %277 = vector.shape_cast %276 : vector<1x32xf32> to vector<1x32xf32>
    %278 = vector.broadcast %277 : vector<1x32xf32> to vector<8x32xf32>
    %cst_73 = arith.constant 0.000000e+00 : f32
    %279 = vector.broadcast %cst_73 : f32 to vector<8x32xf32>
    %c0_i32_74 = arith.constant 0 : i32
    %c8_i32_75 = arith.constant 8 : i32
    %280 = arith.muli %c0_i32_74, %c8_i32_75 : i32
    %281 = tpu.assume_multiple %280, 8 : i32
    %282 = arith.index_cast %281 : i32 to index
    %c0_76 = arith.constant 0 : index
    %283 = vector.load %arg12[%282, %c0_76] : memref<64x96xf32, #tpu.memory_space<vmem>>, vector<8x96xf32>
    %cst_77 = arith.constant dense<0.000000e+00> : vector<8x96xf32>
    %284 = tpu.matmul %279, %275, %cst_77 {dimension_numbers = #tpu.dot_dimension_numbers<[1], [0], [0], [1], [0, 0, 1, 1], [], []>} : vector<8x32xf32>, vector<32x96xf32>, vector<8x96xf32> -> vector<8x96xf32>
    %285 = vector.extract_strided_slice %283 {offsets = [0, 0], sizes = [8, 32], strides = [1, 1]} : vector<8x96xf32> to vector<8x32xf32>
    %286 = vector.extract_strided_slice %284 {offsets = [0, 0], sizes = [8, 32], strides = [1, 1]} : vector<8x96xf32> to vector<8x32xf32>
    %287 = arith.addf %285, %286 : vector<8x32xf32>
    %288 = arith.negf %287 : vector<8x32xf32>
    %289 = math.exp %288 : vector<8x32xf32>
    %cst_78 = arith.constant 1.000000e+00 : f32
    %290 = vector.broadcast %cst_78 : f32 to vector<8x32xf32>
    %291 = arith.addf %290, %289 : vector<8x32xf32>
    %292 = arith.divf %290, %291 : vector<8x32xf32>
    %293 = vector.extract_strided_slice %283 {offsets = [0, 32], sizes = [8, 32], strides = [1, 1]} : vector<8x96xf32> to vector<8x32xf32>
    %294 = vector.extract_strided_slice %284 {offsets = [0, 32], sizes = [8, 32], strides = [1, 1]} : vector<8x96xf32> to vector<8x32xf32>
    %295 = arith.addf %293, %294 : vector<8x32xf32>
    %296 = arith.negf %295 : vector<8x32xf32>
    %297 = math.exp %296 : vector<8x32xf32>
    %cst_79 = arith.constant 1.000000e+00 : f32
    %298 = vector.broadcast %cst_79 : f32 to vector<8x32xf32>
    %299 = arith.addf %298, %297 : vector<8x32xf32>
    %300 = arith.divf %298, %299 : vector<8x32xf32>
    %301 = vector.extract_strided_slice %283 {offsets = [0, 64], sizes = [8, 32], strides = [1, 1]} : vector<8x96xf32> to vector<8x32xf32>
    %302 = vector.extract_strided_slice %284 {offsets = [0, 64], sizes = [8, 32], strides = [1, 1]} : vector<8x96xf32> to vector<8x32xf32>
    %303 = arith.addf %302, %278 : vector<8x32xf32>
    %304 = arith.mulf %292, %303 : vector<8x32xf32>
    %305 = arith.addf %301, %304 : vector<8x32xf32>
    %306 = math.tanh %305 : vector<8x32xf32>
    %307 = arith.subf %279, %306 : vector<8x32xf32>
    %308 = arith.mulf %300, %307 : vector<8x32xf32>
    %309 = arith.addf %306, %308 : vector<8x32xf32>
    %c1_i32_80 = arith.constant 1 : i32
    %c8_i32_81 = arith.constant 8 : i32
    %310 = arith.muli %c1_i32_80, %c8_i32_81 : i32
    %311 = tpu.assume_multiple %310, 8 : i32
    %312 = arith.index_cast %311 : i32 to index
    %c0_82 = arith.constant 0 : index
    %313 = vector.load %arg12[%312, %c0_82] : memref<64x96xf32, #tpu.memory_space<vmem>>, vector<8x96xf32>
    %cst_83 = arith.constant dense<0.000000e+00> : vector<8x96xf32>
    %314 = tpu.matmul %309, %275, %cst_83 {dimension_numbers = #tpu.dot_dimension_numbers<[1], [0], [0], [1], [0, 0, 1, 1], [], []>} : vector<8x32xf32>, vector<32x96xf32>, vector<8x96xf32> -> vector<8x96xf32>
    %315 = vector.extract_strided_slice %313 {offsets = [0, 0], sizes = [8, 32], strides = [1, 1]} : vector<8x96xf32> to vector<8x32xf32>
    %316 = vector.extract_strided_slice %314 {offsets = [0, 0], sizes = [8, 32], strides = [1, 1]} : vector<8x96xf32> to vector<8x32xf32>
    %317 = arith.addf %315, %316 : vector<8x32xf32>
    %318 = arith.negf %317 : vector<8x32xf32>
    %319 = math.exp %318 : vector<8x32xf32>
    %cst_84 = arith.constant 1.000000e+00 : f32
    %320 = vector.broadcast %cst_84 : f32 to vector<8x32xf32>
    %321 = arith.addf %320, %319 : vector<8x32xf32>
    %322 = arith.divf %320, %321 : vector<8x32xf32>
    %323 = vector.extract_strided_slice %313 {offsets = [0, 32], sizes = [8, 32], strides = [1, 1]} : vector<8x96xf32> to vector<8x32xf32>
    %324 = vector.extract_strided_slice %314 {offsets = [0, 32], sizes = [8, 32], strides = [1, 1]} : vector<8x96xf32> to vector<8x32xf32>
    %325 = arith.addf %323, %324 : vector<8x32xf32>
    %326 = arith.negf %325 : vector<8x32xf32>
    %327 = math.exp %326 : vector<8x32xf32>
    %cst_85 = arith.constant 1.000000e+00 : f32
    %328 = vector.broadcast %cst_85 : f32 to vector<8x32xf32>
    %329 = arith.addf %328, %327 : vector<8x32xf32>
    %330 = arith.divf %328, %329 : vector<8x32xf32>
    %331 = vector.extract_strided_slice %313 {offsets = [0, 64], sizes = [8, 32], strides = [1, 1]} : vector<8x96xf32> to vector<8x32xf32>
    %332 = vector.extract_strided_slice %314 {offsets = [0, 64], sizes = [8, 32], strides = [1, 1]} : vector<8x96xf32> to vector<8x32xf32>
    %333 = arith.addf %332, %278 : vector<8x32xf32>
    %334 = arith.mulf %322, %333 : vector<8x32xf32>
    %335 = arith.addf %331, %334 : vector<8x32xf32>
    %336 = math.tanh %335 : vector<8x32xf32>
    %337 = arith.subf %309, %336 : vector<8x32xf32>
    %338 = arith.mulf %330, %337 : vector<8x32xf32>
    %339 = arith.addf %336, %338 : vector<8x32xf32>
    %c2_i32_86 = arith.constant 2 : i32
    %c8_i32_87 = arith.constant 8 : i32
    %340 = arith.muli %c2_i32_86, %c8_i32_87 : i32
    %341 = tpu.assume_multiple %340, 8 : i32
    %342 = arith.index_cast %341 : i32 to index
    %c0_88 = arith.constant 0 : index
    %343 = vector.load %arg12[%342, %c0_88] : memref<64x96xf32, #tpu.memory_space<vmem>>, vector<8x96xf32>
    %cst_89 = arith.constant dense<0.000000e+00> : vector<8x96xf32>
    %344 = tpu.matmul %339, %275, %cst_89 {dimension_numbers = #tpu.dot_dimension_numbers<[1], [0], [0], [1], [0, 0, 1, 1], [], []>} : vector<8x32xf32>, vector<32x96xf32>, vector<8x96xf32> -> vector<8x96xf32>
    %345 = vector.extract_strided_slice %343 {offsets = [0, 0], sizes = [8, 32], strides = [1, 1]} : vector<8x96xf32> to vector<8x32xf32>
    %346 = vector.extract_strided_slice %344 {offsets = [0, 0], sizes = [8, 32], strides = [1, 1]} : vector<8x96xf32> to vector<8x32xf32>
    %347 = arith.addf %345, %346 : vector<8x32xf32>
    %348 = arith.negf %347 : vector<8x32xf32>
    %349 = math.exp %348 : vector<8x32xf32>
    %cst_90 = arith.constant 1.000000e+00 : f32
    %350 = vector.broadcast %cst_90 : f32 to vector<8x32xf32>
    %351 = arith.addf %350, %349 : vector<8x32xf32>
    %352 = arith.divf %350, %351 : vector<8x32xf32>
    %353 = vector.extract_strided_slice %343 {offsets = [0, 32], sizes = [8, 32], strides = [1, 1]} : vector<8x96xf32> to vector<8x32xf32>
    %354 = vector.extract_strided_slice %344 {offsets = [0, 32], sizes = [8, 32], strides = [1, 1]} : vector<8x96xf32> to vector<8x32xf32>
    %355 = arith.addf %353, %354 : vector<8x32xf32>
    %356 = arith.negf %355 : vector<8x32xf32>
    %357 = math.exp %356 : vector<8x32xf32>
    %cst_91 = arith.constant 1.000000e+00 : f32
    %358 = vector.broadcast %cst_91 : f32 to vector<8x32xf32>
    %359 = arith.addf %358, %357 : vector<8x32xf32>
    %360 = arith.divf %358, %359 : vector<8x32xf32>
    %361 = vector.extract_strided_slice %343 {offsets = [0, 64], sizes = [8, 32], strides = [1, 1]} : vector<8x96xf32> to vector<8x32xf32>
    %362 = vector.extract_strided_slice %344 {offsets = [0, 64], sizes = [8, 32], strides = [1, 1]} : vector<8x96xf32> to vector<8x32xf32>
    %363 = arith.addf %362, %278 : vector<8x32xf32>
    %364 = arith.mulf %352, %363 : vector<8x32xf32>
    %365 = arith.addf %361, %364 : vector<8x32xf32>
    %366 = math.tanh %365 : vector<8x32xf32>
    %367 = arith.subf %339, %366 : vector<8x32xf32>
    %368 = arith.mulf %360, %367 : vector<8x32xf32>
    %369 = arith.addf %366, %368 : vector<8x32xf32>
    %c3_i32_92 = arith.constant 3 : i32
    %c8_i32_93 = arith.constant 8 : i32
    %370 = arith.muli %c3_i32_92, %c8_i32_93 : i32
    %371 = tpu.assume_multiple %370, 8 : i32
    %372 = arith.index_cast %371 : i32 to index
    %c0_94 = arith.constant 0 : index
    %373 = vector.load %arg12[%372, %c0_94] : memref<64x96xf32, #tpu.memory_space<vmem>>, vector<8x96xf32>
    %cst_95 = arith.constant dense<0.000000e+00> : vector<8x96xf32>
    %374 = tpu.matmul %369, %275, %cst_95 {dimension_numbers = #tpu.dot_dimension_numbers<[1], [0], [0], [1], [0, 0, 1, 1], [], []>} : vector<8x32xf32>, vector<32x96xf32>, vector<8x96xf32> -> vector<8x96xf32>
    %375 = vector.extract_strided_slice %373 {offsets = [0, 0], sizes = [8, 32], strides = [1, 1]} : vector<8x96xf32> to vector<8x32xf32>
    %376 = vector.extract_strided_slice %374 {offsets = [0, 0], sizes = [8, 32], strides = [1, 1]} : vector<8x96xf32> to vector<8x32xf32>
    %377 = arith.addf %375, %376 : vector<8x32xf32>
    %378 = arith.negf %377 : vector<8x32xf32>
    %379 = math.exp %378 : vector<8x32xf32>
    %cst_96 = arith.constant 1.000000e+00 : f32
    %380 = vector.broadcast %cst_96 : f32 to vector<8x32xf32>
    %381 = arith.addf %380, %379 : vector<8x32xf32>
    %382 = arith.divf %380, %381 : vector<8x32xf32>
    %383 = vector.extract_strided_slice %373 {offsets = [0, 32], sizes = [8, 32], strides = [1, 1]} : vector<8x96xf32> to vector<8x32xf32>
    %384 = vector.extract_strided_slice %374 {offsets = [0, 32], sizes = [8, 32], strides = [1, 1]} : vector<8x96xf32> to vector<8x32xf32>
    %385 = arith.addf %383, %384 : vector<8x32xf32>
    %386 = arith.negf %385 : vector<8x32xf32>
    %387 = math.exp %386 : vector<8x32xf32>
    %cst_97 = arith.constant 1.000000e+00 : f32
    %388 = vector.broadcast %cst_97 : f32 to vector<8x32xf32>
    %389 = arith.addf %388, %387 : vector<8x32xf32>
    %390 = arith.divf %388, %389 : vector<8x32xf32>
    %391 = vector.extract_strided_slice %373 {offsets = [0, 64], sizes = [8, 32], strides = [1, 1]} : vector<8x96xf32> to vector<8x32xf32>
    %392 = vector.extract_strided_slice %374 {offsets = [0, 64], sizes = [8, 32], strides = [1, 1]} : vector<8x96xf32> to vector<8x32xf32>
    %393 = arith.addf %392, %278 : vector<8x32xf32>
    %394 = arith.mulf %382, %393 : vector<8x32xf32>
    %395 = arith.addf %391, %394 : vector<8x32xf32>
    %396 = math.tanh %395 : vector<8x32xf32>
    %397 = arith.subf %369, %396 : vector<8x32xf32>
    %398 = arith.mulf %390, %397 : vector<8x32xf32>
    %399 = arith.addf %396, %398 : vector<8x32xf32>
    %c4_i32_98 = arith.constant 4 : i32
    %c8_i32_99 = arith.constant 8 : i32
    %400 = arith.muli %c4_i32_98, %c8_i32_99 : i32
    %401 = tpu.assume_multiple %400, 8 : i32
    %402 = arith.index_cast %401 : i32 to index
    %c0_100 = arith.constant 0 : index
    %403 = vector.load %arg12[%402, %c0_100] : memref<64x96xf32, #tpu.memory_space<vmem>>, vector<8x96xf32>
    %cst_101 = arith.constant dense<0.000000e+00> : vector<8x96xf32>
    %404 = tpu.matmul %399, %275, %cst_101 {dimension_numbers = #tpu.dot_dimension_numbers<[1], [0], [0], [1], [0, 0, 1, 1], [], []>} : vector<8x32xf32>, vector<32x96xf32>, vector<8x96xf32> -> vector<8x96xf32>
    %405 = vector.extract_strided_slice %403 {offsets = [0, 0], sizes = [8, 32], strides = [1, 1]} : vector<8x96xf32> to vector<8x32xf32>
    %406 = vector.extract_strided_slice %404 {offsets = [0, 0], sizes = [8, 32], strides = [1, 1]} : vector<8x96xf32> to vector<8x32xf32>
    %407 = arith.addf %405, %406 : vector<8x32xf32>
    %408 = arith.negf %407 : vector<8x32xf32>
    %409 = math.exp %408 : vector<8x32xf32>
    %cst_102 = arith.constant 1.000000e+00 : f32
    %410 = vector.broadcast %cst_102 : f32 to vector<8x32xf32>
    %411 = arith.addf %410, %409 : vector<8x32xf32>
    %412 = arith.divf %410, %411 : vector<8x32xf32>
    %413 = vector.extract_strided_slice %403 {offsets = [0, 32], sizes = [8, 32], strides = [1, 1]} : vector<8x96xf32> to vector<8x32xf32>
    %414 = vector.extract_strided_slice %404 {offsets = [0, 32], sizes = [8, 32], strides = [1, 1]} : vector<8x96xf32> to vector<8x32xf32>
    %415 = arith.addf %413, %414 : vector<8x32xf32>
    %416 = arith.negf %415 : vector<8x32xf32>
    %417 = math.exp %416 : vector<8x32xf32>
    %cst_103 = arith.constant 1.000000e+00 : f32
    %418 = vector.broadcast %cst_103 : f32 to vector<8x32xf32>
    %419 = arith.addf %418, %417 : vector<8x32xf32>
    %420 = arith.divf %418, %419 : vector<8x32xf32>
    %421 = vector.extract_strided_slice %403 {offsets = [0, 64], sizes = [8, 32], strides = [1, 1]} : vector<8x96xf32> to vector<8x32xf32>
    %422 = vector.extract_strided_slice %404 {offsets = [0, 64], sizes = [8, 32], strides = [1, 1]} : vector<8x96xf32> to vector<8x32xf32>
    %423 = arith.addf %422, %278 : vector<8x32xf32>
    %424 = arith.mulf %412, %423 : vector<8x32xf32>
    %425 = arith.addf %421, %424 : vector<8x32xf32>
    %426 = math.tanh %425 : vector<8x32xf32>
    %427 = arith.subf %399, %426 : vector<8x32xf32>
    %428 = arith.mulf %420, %427 : vector<8x32xf32>
    %429 = arith.addf %426, %428 : vector<8x32xf32>
    %c5_i32_104 = arith.constant 5 : i32
    %c8_i32_105 = arith.constant 8 : i32
    %430 = arith.muli %c5_i32_104, %c8_i32_105 : i32
    %431 = tpu.assume_multiple %430, 8 : i32
    %432 = arith.index_cast %431 : i32 to index
    %c0_106 = arith.constant 0 : index
    %433 = vector.load %arg12[%432, %c0_106] : memref<64x96xf32, #tpu.memory_space<vmem>>, vector<8x96xf32>
    %cst_107 = arith.constant dense<0.000000e+00> : vector<8x96xf32>
    %434 = tpu.matmul %429, %275, %cst_107 {dimension_numbers = #tpu.dot_dimension_numbers<[1], [0], [0], [1], [0, 0, 1, 1], [], []>} : vector<8x32xf32>, vector<32x96xf32>, vector<8x96xf32> -> vector<8x96xf32>
    %435 = vector.extract_strided_slice %433 {offsets = [0, 0], sizes = [8, 32], strides = [1, 1]} : vector<8x96xf32> to vector<8x32xf32>
    %436 = vector.extract_strided_slice %434 {offsets = [0, 0], sizes = [8, 32], strides = [1, 1]} : vector<8x96xf32> to vector<8x32xf32>
    %437 = arith.addf %435, %436 : vector<8x32xf32>
    %438 = arith.negf %437 : vector<8x32xf32>
    %439 = math.exp %438 : vector<8x32xf32>
    %cst_108 = arith.constant 1.000000e+00 : f32
    %440 = vector.broadcast %cst_108 : f32 to vector<8x32xf32>
    %441 = arith.addf %440, %439 : vector<8x32xf32>
    %442 = arith.divf %440, %441 : vector<8x32xf32>
    %443 = vector.extract_strided_slice %433 {offsets = [0, 32], sizes = [8, 32], strides = [1, 1]} : vector<8x96xf32> to vector<8x32xf32>
    %444 = vector.extract_strided_slice %434 {offsets = [0, 32], sizes = [8, 32], strides = [1, 1]} : vector<8x96xf32> to vector<8x32xf32>
    %445 = arith.addf %443, %444 : vector<8x32xf32>
    %446 = arith.negf %445 : vector<8x32xf32>
    %447 = math.exp %446 : vector<8x32xf32>
    %cst_109 = arith.constant 1.000000e+00 : f32
    %448 = vector.broadcast %cst_109 : f32 to vector<8x32xf32>
    %449 = arith.addf %448, %447 : vector<8x32xf32>
    %450 = arith.divf %448, %449 : vector<8x32xf32>
    %451 = vector.extract_strided_slice %433 {offsets = [0, 64], sizes = [8, 32], strides = [1, 1]} : vector<8x96xf32> to vector<8x32xf32>
    %452 = vector.extract_strided_slice %434 {offsets = [0, 64], sizes = [8, 32], strides = [1, 1]} : vector<8x96xf32> to vector<8x32xf32>
    %453 = arith.addf %452, %278 : vector<8x32xf32>
    %454 = arith.mulf %442, %453 : vector<8x32xf32>
    %455 = arith.addf %451, %454 : vector<8x32xf32>
    %456 = math.tanh %455 : vector<8x32xf32>
    %457 = arith.subf %429, %456 : vector<8x32xf32>
    %458 = arith.mulf %450, %457 : vector<8x32xf32>
    %459 = arith.addf %456, %458 : vector<8x32xf32>
    %c6_i32_110 = arith.constant 6 : i32
    %c8_i32_111 = arith.constant 8 : i32
    %460 = arith.muli %c6_i32_110, %c8_i32_111 : i32
    %461 = tpu.assume_multiple %460, 8 : i32
    %462 = arith.index_cast %461 : i32 to index
    %c0_112 = arith.constant 0 : index
    %463 = vector.load %arg12[%462, %c0_112] : memref<64x96xf32, #tpu.memory_space<vmem>>, vector<8x96xf32>
    %cst_113 = arith.constant dense<0.000000e+00> : vector<8x96xf32>
    %464 = tpu.matmul %459, %275, %cst_113 {dimension_numbers = #tpu.dot_dimension_numbers<[1], [0], [0], [1], [0, 0, 1, 1], [], []>} : vector<8x32xf32>, vector<32x96xf32>, vector<8x96xf32> -> vector<8x96xf32>
    %465 = vector.extract_strided_slice %463 {offsets = [0, 0], sizes = [8, 32], strides = [1, 1]} : vector<8x96xf32> to vector<8x32xf32>
    %466 = vector.extract_strided_slice %464 {offsets = [0, 0], sizes = [8, 32], strides = [1, 1]} : vector<8x96xf32> to vector<8x32xf32>
    %467 = arith.addf %465, %466 : vector<8x32xf32>
    %468 = arith.negf %467 : vector<8x32xf32>
    %469 = math.exp %468 : vector<8x32xf32>
    %cst_114 = arith.constant 1.000000e+00 : f32
    %470 = vector.broadcast %cst_114 : f32 to vector<8x32xf32>
    %471 = arith.addf %470, %469 : vector<8x32xf32>
    %472 = arith.divf %470, %471 : vector<8x32xf32>
    %473 = vector.extract_strided_slice %463 {offsets = [0, 32], sizes = [8, 32], strides = [1, 1]} : vector<8x96xf32> to vector<8x32xf32>
    %474 = vector.extract_strided_slice %464 {offsets = [0, 32], sizes = [8, 32], strides = [1, 1]} : vector<8x96xf32> to vector<8x32xf32>
    %475 = arith.addf %473, %474 : vector<8x32xf32>
    %476 = arith.negf %475 : vector<8x32xf32>
    %477 = math.exp %476 : vector<8x32xf32>
    %cst_115 = arith.constant 1.000000e+00 : f32
    %478 = vector.broadcast %cst_115 : f32 to vector<8x32xf32>
    %479 = arith.addf %478, %477 : vector<8x32xf32>
    %480 = arith.divf %478, %479 : vector<8x32xf32>
    %481 = vector.extract_strided_slice %463 {offsets = [0, 64], sizes = [8, 32], strides = [1, 1]} : vector<8x96xf32> to vector<8x32xf32>
    %482 = vector.extract_strided_slice %464 {offsets = [0, 64], sizes = [8, 32], strides = [1, 1]} : vector<8x96xf32> to vector<8x32xf32>
    %483 = arith.addf %482, %278 : vector<8x32xf32>
    %484 = arith.mulf %472, %483 : vector<8x32xf32>
    %485 = arith.addf %481, %484 : vector<8x32xf32>
    %486 = math.tanh %485 : vector<8x32xf32>
    %487 = arith.subf %459, %486 : vector<8x32xf32>
    %488 = arith.mulf %480, %487 : vector<8x32xf32>
    %489 = arith.addf %486, %488 : vector<8x32xf32>
    %c7_i32_116 = arith.constant 7 : i32
    %c8_i32_117 = arith.constant 8 : i32
    %490 = arith.muli %c7_i32_116, %c8_i32_117 : i32
    %491 = tpu.assume_multiple %490, 8 : i32
    %492 = arith.index_cast %491 : i32 to index
    %c0_118 = arith.constant 0 : index
    %493 = vector.load %arg12[%492, %c0_118] : memref<64x96xf32, #tpu.memory_space<vmem>>, vector<8x96xf32>
    %cst_119 = arith.constant dense<0.000000e+00> : vector<8x96xf32>
    %494 = tpu.matmul %489, %275, %cst_119 {dimension_numbers = #tpu.dot_dimension_numbers<[1], [0], [0], [1], [0, 0, 1, 1], [], []>} : vector<8x32xf32>, vector<32x96xf32>, vector<8x96xf32> -> vector<8x96xf32>
    %495 = vector.extract_strided_slice %493 {offsets = [0, 0], sizes = [8, 32], strides = [1, 1]} : vector<8x96xf32> to vector<8x32xf32>
    %496 = vector.extract_strided_slice %494 {offsets = [0, 0], sizes = [8, 32], strides = [1, 1]} : vector<8x96xf32> to vector<8x32xf32>
    %497 = arith.addf %495, %496 : vector<8x32xf32>
    %498 = arith.negf %497 : vector<8x32xf32>
    %499 = math.exp %498 : vector<8x32xf32>
    %cst_120 = arith.constant 1.000000e+00 : f32
    %500 = vector.broadcast %cst_120 : f32 to vector<8x32xf32>
    %501 = arith.addf %500, %499 : vector<8x32xf32>
    %502 = arith.divf %500, %501 : vector<8x32xf32>
    %503 = vector.extract_strided_slice %493 {offsets = [0, 32], sizes = [8, 32], strides = [1, 1]} : vector<8x96xf32> to vector<8x32xf32>
    %504 = vector.extract_strided_slice %494 {offsets = [0, 32], sizes = [8, 32], strides = [1, 1]} : vector<8x96xf32> to vector<8x32xf32>
    %505 = arith.addf %503, %504 : vector<8x32xf32>
    %506 = arith.negf %505 : vector<8x32xf32>
    %507 = math.exp %506 : vector<8x32xf32>
    %cst_121 = arith.constant 1.000000e+00 : f32
    %508 = vector.broadcast %cst_121 : f32 to vector<8x32xf32>
    %509 = arith.addf %508, %507 : vector<8x32xf32>
    %510 = arith.divf %508, %509 : vector<8x32xf32>
    %511 = vector.extract_strided_slice %493 {offsets = [0, 64], sizes = [8, 32], strides = [1, 1]} : vector<8x96xf32> to vector<8x32xf32>
    %512 = vector.extract_strided_slice %494 {offsets = [0, 64], sizes = [8, 32], strides = [1, 1]} : vector<8x96xf32> to vector<8x32xf32>
    %513 = arith.addf %512, %278 : vector<8x32xf32>
    %514 = arith.mulf %502, %513 : vector<8x32xf32>
    %515 = arith.addf %511, %514 : vector<8x32xf32>
    %516 = math.tanh %515 : vector<8x32xf32>
    %517 = arith.subf %489, %516 : vector<8x32xf32>
    %518 = arith.mulf %510, %517 : vector<8x32xf32>
    %519 = arith.addf %516, %518 : vector<8x32xf32>
    %c8_i32_122 = arith.constant 8 : i32
    %c0_123 = arith.constant 0 : index
    %c0_124 = arith.constant 0 : index
    %520 = vector.load %arg9[%c0_123, %c0_124] : memref<1x32xf32, #tpu.memory_space<vmem>>, vector<1x32xf32>
    %521 = vector.broadcast %520 : vector<1x32xf32> to vector<8x32xf32>
    %522 = arith.mulf %519, %521 : vector<8x32xf32>
    %cst_125 = arith.constant dense<0.000000e+00> : vector<8xf32>
    %523 = vector.multi_reduction <add>, %522, %cst_125 [1] : vector<8x32xf32> to vector<8xf32>
    %524 = vector.shape_cast %523 : vector<8xf32> to vector<8x1xf32>
    %c0_126 = arith.constant 0 : index
    %c0_127 = arith.constant 0 : index
    %525 = vector.load %arg10[%c0_126, %c0_127] : memref<1x1xf32, #tpu.memory_space<vmem>>, vector<1x1xf32>
    %526 = vector.broadcast %525 : vector<1x1xf32> to vector<8x1xf32>
    %527 = arith.addf %524, %526 : vector<8x1xf32>
    %c0_128 = arith.constant 0 : index
    %c0_129 = arith.constant 0 : index
    %528 = vector.load %arg11[%c0_128, %c0_129] : memref<8x1xf32, #tpu.memory_space<vmem>>, vector<8x1xf32>
    tpu.vector_store %arg11[%c0_128, %c0_129], %527 {strides = array<i32>} : memref<8x1xf32, #tpu.memory_space<vmem>>, vector<8x1xf32>,
    return
  }
}

</mosaic_0001>

<llo_original>
// kernel: gru_model_forward.1
$region0: #{gru_model_forward.1}
  #allocation0 [shape = 'u32[]', space=smem, size = 0x4, offset = 0x4, fixed_abs, tag = 'smem constant byte address 0x4 - core index']
  #allocation1 [shape = 'u32[144,128]{1,0:T(1,128)}', space=vmem, size = 0x12000, scoped, tag = 'internal scratch']
  #allocation2 [shape = 'f32[64,96]{1,0:T(8,128)}', space=vmem, size = 0x8000, scoped, tag = 'scratch operand']
  #allocation3 [shape = 'f32[64,32]{1,0:T(8,128)}', space=vmem, size = 0x8000, scoped, tag = 'scratch operand']
  #allocation4 [shape = 'f32[1,1]{1,0:T(1,128)S(1)}', space=vmem, size = 0x200, scoped, tag = 'scoped memory for gru_model_forward.1']
  %s0 = inlined_call_operand.vmem [shape: f32[64,4], index: 0, kind: input, shape index: {}]
  %s1 = inlined_call_operand.vmem [shape: f32[4,96], index: 1, kind: input, shape index: {}]
  %s2 = inlined_call_operand.vmem [shape: f32[32,96], index: 2, kind: input, shape index: {}]
  %s3 = inlined_call_operand.vmem [shape: f32[1,96], index: 3, kind: input, shape index: {}]
  %s4 = inlined_call_operand.vmem [shape: f32[1,32], index: 4, kind: input, shape index: {}]
  %s5 = inlined_call_operand.vmem [shape: f32[32,96], index: 5, kind: input, shape index: {}]
  %s6 = inlined_call_operand.vmem [shape: f32[32,96], index: 6, kind: input, shape index: {}]
  %s7 = inlined_call_operand.vmem [shape: f32[1,96], index: 7, kind: input, shape index: {}]
  %s8 = inlined_call_operand.vmem [shape: f32[1,32], index: 8, kind: input, shape index: {}]
  %s9 = inlined_call_operand.vmem [shape: f32[1,32], index: 9, kind: input, shape index: {}]
  %s10 = inlined_call_operand.<no memory space> [shape: f32[1,1], index: 10, kind: input, shape index: {}]
  %s11 = inlined_call_operand.vmem [shape: f32[8,1], index: 11, kind: output, shape index: {}]
  %s12 = sld [smem:[#allocation0]]
  $region54: #{gru_model_forward.1} parent=0
    _
  %s14 = ssub.s32 1, %s12
  %s15 = scalar_select 0, %s14, %s12
  %v16 = vstv %s10
  %17 = vst [vmem:[#allocation4] sm:$0x1] %v16
  // Predicated region
  $region2: #{gru_model_forward.1} parent=0 // pred_check
    _
  $region3: #{gru_model_forward.1} parent=0 // pred_check_branch
    %19 = sbr.rel (0) target = $region5
  $region4: #{gru_model_forward.1} parent=0 // pred_region
    _
  $region5: #{gru_model_forward.1} parent=0 // pred_fallthru
    _
  // Predicated region
  $region6: #{gru_model_forward.1} parent=0 // pred_check
    _
  $region7: #{gru_model_forward.1} parent=0 // pred_check_branch
    %21 = sbr.rel (0) target = $region9
  $region8: #{gru_model_forward.1} parent=0 // pred_region
    _
  $region9: #{gru_model_forward.1} parent=0 // pred_fallthru
    _
  // Predicated region
  $region10: #{gru_model_forward.1} parent=0 // pred_check
    _
  $region11: #{gru_model_forward.1} parent=0 // pred_check_branch
    %23 = sbr.rel (0) target = $region13
  $region12: #{gru_model_forward.1} parent=0 // pred_region
    _
  $region13: #{gru_model_forward.1} parent=0 // pred_fallthru
    _
  // Predicated region
  $region14: #{gru_model_forward.1} parent=0 // pred_check
    _
  $region15: #{gru_model_forward.1} parent=0 // pred_check_branch
    %25 = sbr.rel (0) target = $region17
  $region16: #{gru_model_forward.1} parent=0 // pred_region
    _
  $region17: #{gru_model_forward.1} parent=0 // pred_fallthru
    _
  // Predicated region
  $region18: #{gru_model_forward.1} parent=0 // pred_check
    _
  $region19: #{gru_model_forward.1} parent=0 // pred_check_branch
    %27 = sbr.rel (0) target = $region21
  $region20: #{gru_model_forward.1} parent=0 // pred_region
    _
  $region21: #{gru_model_forward.1} parent=0 // pred_fallthru
    _
  // Predicated region
  $region22: #{gru_model_forward.1} parent=0 // pred_check
    _
  $region23: #{gru_model_forward.1} parent=0 // pred_check_branch
    %29 = sbr.rel (0) target = $region25
  $region24: #{gru_model_forward.1} parent=0 // pred_region
    _
  $region25: #{gru_model_forward.1} parent=0 // pred_fallthru
    _
  // Predicated region
  $region26: #{gru_model_forward.1} parent=0 // pred_check
    _
  $region27: #{gru_model_forward.1} parent=0 // pred_check_branch
    %31 = sbr.rel (0) target = $region29
  $region28: #{gru_model_forward.1} parent=0 // pred_region
    _
  $region29: #{gru_model_forward.1} parent=0 // pred_fallthru
    _
  // Predicated region
  $region30: #{gru_model_forward.1} parent=0 // pred_check
    _
  $region31: #{gru_model_forward.1} parent=0 // pred_check_branch
    %33 = sbr.rel (0) target = $region33
  $region32: #{gru_model_forward.1} parent=0 // pred_region
    _
  $region33: #{gru_model_forward.1} parent=0 // pred_fallthru
    _
  // Predicated region
  $region34: #{gru_model_forward.1} parent=0 // pred_check
    _
  $region35: #{gru_model_forward.1} parent=0 // pred_check_branch
    %35 = sbr.rel (0) target = $region37
  $region36: #{gru_model_forward.1} parent=0 // pred_region
    _
  $region37: #{gru_model_forward.1} parent=0 // pred_fallthru
    _
  // Predicated region
  $region38: #{gru_model_forward.1} parent=0 // pred_check
    _
  $region39: #{gru_model_forward.1} parent=0 // pred_check_branch
    %37 = sbr.rel (0) target = $region41
  $region40: #{gru_model_forward.1} parent=0 // pred_region
    _
  $region41: #{gru_model_forward.1} parent=0 // pred_fallthru
    _
  // Predicated region
  $region42: #{gru_model_forward.1} parent=0 // pred_check
    _
  $region43: #{gru_model_forward.1} parent=0 // pred_check_branch
    %39 = sbr.rel (0) target = $region45
  $region44: #{gru_model_forward.1} parent=0 // pred_region
    _
  $region45: #{gru_model_forward.1} parent=0 // pred_fallthru
    _
  %v40 = vld [vmem:[%s0] sm:$0xff]
  %v41 = vld [vmem:[%s0 + $0x8] sm:$0xff]
  %v42 = vld [vmem:[%s0 + $0x10] sm:$0xff]
  %v43 = vld [vmem:[%s0 + $0x18] sm:$0xff]
  %v44 = vld [vmem:[%s0 + $0x20] sm:$0xff]
  %v45 = vld [vmem:[%s0 + $0x28] sm:$0xff]
  %v46 = vld [vmem:[%s0 + $0x30] sm:$0xff]
  %v47 = vld [vmem:[%s0 + $0x38] sm:$0xff]
  %v48 = vld [vmem:[%s1] sm:$0xf]
  %v49 = vld [vmem:[%s3] sm:$0x1]
  %v51 = vlaneseq
  %v52 = vshrl.u32 %v51, 7
  %v53 = vsub.s32 0, %v52
  %v54 = vrot.slane %v49, %v53
  %vm56 = vcmask 31744
  %v58 = vsel %vm56, %v40, 0
  %v61 = vsel %vm56, %v41, 0
  %v64 = vsel %vm56, %v42, 0
  %v67 = vsel %vm56, %v43, 0
  %v70 = vsel %vm56, %v44, 0
  %v73 = vsel %vm56, %v45, 0
  %v76 = vsel %vm56, %v46, 0
  %v79 = vsel %vm56, %v47, 0
  %vm81 = vcmask 1043456
  %v83 = vsel %vm81, %v48, 0
  %85 = vmatprep.subr.mxu0 0.0
  %86 = vmatpush1.msra.mxu0 %v83
  %87 = vmatprep.subr.mxu0 0.0
  %88 = vmatpush1.msra.mxu0 0.0
  %89 = vmatprep.subr.mxu0 0.0
  %90 = vmatpush1.msra.mxu0 0.0
  %91 = vmatprep.subr.mxu0 0.0
  %92 = vmatpush1.msra.mxu0 0.0
  %93 = vmatprep.subr.mxu0 0.0
  %94 = vmatpush1.msra.mxu0 0.0
  %95 = vmatprep.subr.mxu0 0.0
  %96 = vmatpush1.msra.mxu0 0.0
  %97 = vmatprep.subr.mxu0 0.0
  %98 = vmatpush1.msra.mxu0 0.0
  %99 = vmatprep.subr.mxu0 0.0
  %100 = vmatpush1.msra.mxu0 0.0
  %101 = vmatprep.subr.mxu0 0.0
  %102 = vmatpush1.msra.mxu0 0.0
  %103 = vmatprep.subr.mxu0 0.0
  %104 = vmatpush1.msra.mxu0 0.0
  %105 = vmatprep.subr.mxu0 0.0
  %106 = vmatpush1.msra.mxu0 0.0
  %107 = vmatprep.subr.mxu0 0.0
  %108 = vmatpush1.msra.mxu0 0.0
  %109 = vmatprep.subr.mxu0 0.0
  %110 = vmatpush1.msra.mxu0 0.0
  %111 = vmatprep.subr.mxu0 0.0
  %112 = vmatpush1.msra.mxu0 0.0
  %113 = vmatprep.subr.mxu0 0.0
  %114 = vmatpush1.msra.mxu0 0.0
  %115 = vmatprep.subr.mxu0 0.0
  %116 = vmatpush1.msra.mxu0 0.0
  %117 = vmatprep.subr.mxu0 0.0
  %118 = vmatpush1.msra.mxu0 0.0
  %119 = vmatprep.subr.mxu0 0.0
  %120 = vmatpush1.msra.mxu0 0.0
  %121 = vmatprep.subr.mxu0 0.0
  %122 = vmatpush1.msra.mxu0 0.0
  %123 = vmatprep.subr.mxu0 0.0
  %124 = vmatpush1.msra.mxu0 0.0
  %125 = vmatprep.subr.mxu0 0.0
  %126 = vmatpush1.msra.mxu0 0.0
  %127 = vmatprep.subr.mxu0 0.0
  %128 = vmatpush1.msra.mxu0 0.0
  %129 = vmatprep.subr.mxu0 0.0
  %130 = vmatpush1.msra.mxu0 0.0
  %131 = vmatprep.subr.mxu0 0.0
  %132 = vmatpush1.msra.mxu0 0.0
  %133 = vmatprep.subr.mxu0 0.0
  %134 = vmatpush1.msra.mxu0 0.0
  %135 = vmatprep.subr.mxu0 0.0
  %136 = vmatpush1.msra.mxu0 0.0
  %137 = vmatprep.subr.mxu0 0.0
  %138 = vmatpush1.msra.mxu0 0.0
  %139 = vmatprep.subr.mxu0 0.0
  %140 = vmatpush1.msra.mxu0 0.0
  %141 = vmatprep.subr.mxu0 0.0
  %142 = vmatpush1.msra.mxu0 0.0
  %143 = vmatprep.subr.mxu0 0.0
  %144 = vmatpush1.msra.mxu0 0.0
  %145 = vmatprep.subr.mxu0 0.0
  %146 = vmatpush1.msra.mxu0 0.0
  %147 = vmatprep.subr.mxu0 0.0
  %148 = vmatpush1.msra.mxu0 0.0
  %149 = vmatprep.mubr.f32.mxu0 0.0
  %150 = vmatmul.mubr.f32.gmra.mrb[0].mxu0 %v58
  %v151 = vpop.f32.mrb[0].mxu0
  %v152 = vadd.f32 %v54, %v151
  %v153 = vpop.f32.mrb[0].mxu0
  %154 = vmatprep.mubr.f32.mxu0 0.0
  %155 = vmatmul.mubr.f32.gmra.mrb[0].mxu0 %v61
  %v156 = vpop.f32.mrb[0].mxu0
  %v157 = vadd.f32 %v54, %v156
  %v158 = vpop.f32.mrb[0].mxu0
  %159 = vmatprep.mubr.f32.mxu0 0.0
  %160 = vmatmul.mubr.f32.gmra.mrb[0].mxu0 %v64
  %v161 = vpop.f32.mrb[0].mxu0
  %v162 = vadd.f32 %v54, %v161
  %v163 = vpop.f32.mrb[0].mxu0
  %164 = vmatprep.mubr.f32.mxu0 0.0
  %165 = vmatmul.mubr.f32.gmra.mrb[0].mxu0 %v67
  %v166 = vpop.f32.mrb[0].mxu0
  %v167 = vadd.f32 %v54, %v166
  %v168 = vpop.f32.mrb[0].mxu0
  %169 = vmatprep.mubr.f32.mxu0 0.0
  %170 = vmatmul.mubr.f32.gmra.mrb[0].mxu0 %v70
  %v171 = vpop.f32.mrb[0].mxu0
  %v172 = vadd.f32 %v54, %v171
  %v173 = vpop.f32.mrb[0].mxu0
  %174 = vmatprep.mubr.f32.mxu0 0.0
  %175 = vmatmul.mubr.f32.gmra.mrb[0].mxu0 %v73
  %v176 = vpop.f32.mrb[0].mxu0
  %v177 = vadd.f32 %v54, %v176
  %v178 = vpop.f32.mrb[0].mxu0
  %179 = vmatprep.mubr.f32.mxu0 0.0
  %180 = vmatmul.mubr.f32.gmra.mrb[0].mxu0 %v76
  %v181 = vpop.f32.mrb[0].mxu0
  %v182 = vadd.f32 %v54, %v181
  %v183 = vpop.f32.mrb[0].mxu0
  %184 = vmatprep.mubr.f32.mxu0 0.0
  %185 = vmatmul.mubr.f32.gmra.mrb[0].mxu0 %v79
  %v186 = vpop.f32.mrb[0].mxu0
  %v187 = vadd.f32 %v54, %v186
  %v188 = vpop.f32.mrb[0].mxu0
  %189 = vdwg.mxu0
  %vm190 = vcmask 785408
  %191 = vst.msk [vmem:[#allocation2] sm:$0xff] %vm190, %v152
  %192 = vst.msk [vmem:[#allocation2 + $0x8] sm:$0xff] %vm190, %v157
  %193 = vst.msk [vmem:[#allocation2 + $0x10] sm:$0xff] %vm190, %v162
  %194 = vst.msk [vmem:[#allocation2 + $0x18] sm:$0xff] %vm190, %v167
  %195 = vst.msk [vmem:[#allocation2 + $0x20] sm:$0xff] %vm190, %v172
  %196 = vst.msk [vmem:[#allocation2 + $0x28] sm:$0xff] %vm190, %v177
  %197 = vst.msk [vmem:[#allocation2 + $0x30] sm:$0xff] %vm190, %v182
  %198 = vst.msk [vmem:[#allocation2 + $0x38] sm:$0xff] %vm190, %v187
  %v199 = vld [vmem:[%s2] sm:$0xff]
  %v200 = vld [vmem:[%s2 + $0x8] sm:$0xff]
  %v201 = vld [vmem:[%s2 + $0x10] sm:$0xff]
  %v202 = vld [vmem:[%s2 + $0x18] sm:$0xff]
  %v203 = vld [vmem:[%s4] sm:$0x1]
  %v205 = vlaneseq
  %v206 = vshrl.u32 %v205, 7
  %v207 = vsub.s32 0, %v206
  %v208 = vrot.slane %v203, %v207
  %v209 = vld [vmem:[#allocation2] sm:$0xff]
  %vm210 = vcmask 261120
  %v212 = vsel %vm210, 0.0, 0
  %214 = vmatprep.subr.mxu0 0.0
  %215 = vmatpush1.msra.mxu0 %v199
  %216 = vmatprep.subr.mxu0 0.0
  %217 = vmatpush1.msra.mxu0 %v200
  %218 = vmatprep.subr.mxu0 0.0
  %219 = vmatpush1.msra.mxu0 %v201
  %220 = vmatprep.subr.mxu0 0.0
  %221 = vmatpush1.msra.mxu0 %v202
  %222 = vmatprep.subr.mxu0 0.0
  %223 = vmatpush1.msra.mxu0 0.0
  %224 = vmatprep.subr.mxu0 0.0
  %225 = vmatpush1.msra.mxu0 0.0
  %226 = vmatprep.subr.mxu0 0.0
  %227 = vmatpush1.msra.mxu0 0.0
  %228 = vmatprep.subr.mxu0 0.0
  %229 = vmatpush1.msra.mxu0 0.0
  %230 = vmatprep.subr.mxu0 0.0
  %231 = vmatpush1.msra.mxu0 0.0
  %232 = vmatprep.subr.mxu0 0.0
  %233 = vmatpush1.msra.mxu0 0.0
  %234 = vmatprep.subr.mxu0 0.0
  %235 = vmatpush1.msra.mxu0 0.0
  %236 = vmatprep.subr.mxu0 0.0
  %237 = vmatpush1.msra.mxu0 0.0
  %238 = vmatprep.subr.mxu0 0.0
  %239 = vmatpush1.msra.mxu0 0.0
  %240 = vmatprep.subr.mxu0 0.0
  %241 = vmatpush1.msra.mxu0 0.0
  %242 = vmatprep.subr.mxu0 0.0
  %243 = vmatpush1.msra.mxu0 0.0
  %244 = vmatprep.subr.mxu0 0.0
  %245 = vmatpush1.msra.mxu0 0.0
  %246 = vmatprep.subr.mxu0 0.0
  %247 = vmatpush1.msra.mxu0 0.0
  %248 = vmatprep.subr.mxu0 0.0
  %249 = vmatpush1.msra.mxu0 0.0
  %250 = vmatprep.subr.mxu0 0.0
  %251 = vmatpush1.msra.mxu0 0.0
  %252 = vmatprep.subr.mxu0 0.0
  %253 = vmatpush1.msra.mxu0 0.0
  %254 = vmatprep.subr.mxu0 0.0
  %255 = vmatpush1.msra.mxu0 0.0
  %256 = vmatprep.subr.mxu0 0.0
  %257 = vmatpush1.msra.mxu0 0.0
  %258 = vmatprep.subr.mxu0 0.0
  %259 = vmatpush1.msra.mxu0 0.0
  %260 = vmatprep.subr.mxu0 0.0
  %261 = vmatpush1.msra.mxu0 0.0
  %262 = vmatprep.subr.mxu0 0.0
  %263 = vmatpush1.msra.mxu0 0.0
  %264 = vmatprep.subr.mxu0 0.0
  %265 = vmatpush1.msra.mxu0 0.0
  %266 = vmatprep.subr.mxu0 0.0
  %267 = vmatpush1.msra.mxu0 0.0
  %268 = vmatprep.subr.mxu0 0.0
  %269 = vmatpush1.msra.mxu0 0.0
  %270 = vmatprep.subr.mxu0 0.0
  %271 = vmatpush1.msra.mxu0 0.0
  %272 = vmatprep.subr.mxu0 0.0
  %273 = vmatpush1.msra.mxu0 0.0
  %274 = vmatprep.subr.mxu0 0.0
  %275 = vmatpush1.msra.mxu0 0.0
  %276 = vmatprep.subr.mxu0 0.0
  %277 = vmatpush1.msra.mxu0 0.0
  %278 = vmatprep.mubr.f32.mxu0 0.0
  %279 = vmatmul.mubr.f32.gmra.mrb[0].mxu0 %v212
  %v280 = vpop.f32.mrb[0].mxu0
  %v281 = vadd.f32 0.0, %v280
  %v282 = vpop.f32.mrb[0].mxu0
  %283 = vdwg.mxu0
  %v284 = vadd.f32 %v209, %v281
  %v285 = vxor.u32 %v284, 2147483648
  %v286 = vmul.f32 %v285, 1.442695
  %v287 = vpow.pop %v286
  %v288 = vadd.f32 %v287, 1.0
  %v289 = vrcp.pop %v288
  %v290 = vmul.f32 1.0, %v289
  %291 = vrot.lane.b32.xlu0 %v208, 64
  %v292 = vpop.permute.xlu0 %291
  %v294 = vadd.f32 %v281, %v292
  %296 = vrot.lane.b32.xlu0 %v294, 64
  %v297 = vpop.permute.xlu0 %296
  %v299 = vmul.f32 %v290, %v297
  %301 = vrot.lane.b32.xlu0 %v299, 64
  %v302 = vpop.permute.xlu0 %301
  %v304 = vadd.f32 %v209, %v302
  %v305 = vtanh.pop %v304
  %v306 = vsub.f32 0.0, %v305
  %308 = vrot.lane.b32.xlu0 %v306, 96
  %v309 = vpop.permute.xlu0 %308
  %v311 = vmul.f32 %v290, %v309
  %313 = vrot.lane.b32.xlu0 %v311, 32
  %v314 = vpop.permute.xlu0 %313
  %v316 = vadd.f32 %v305, %v314
  %318 = vrot.lane.b32.xlu0 %v316, 64
  %v319 = vpop.permute.xlu0 %318
  %321 = vst.msk [vmem:[#allocation3] sm:$0xff] %vm210, %v319
  %s322 = scalar_lea.vmem [#allocation2], 8
  %v323 = vld [vmem:[%s322] sm:$0xff]
  %v324 = vsel %vm210, %v319, 0
  %326 = vmatprep.subr.mxu0 0.0
  %327 = vmatpush1.msra.mxu0 %v199
  %328 = vmatprep.subr.mxu0 0.0
  %329 = vmatpush1.msra.mxu0 %v200
  %330 = vmatprep.subr.mxu0 0.0
  %331 = vmatpush1.msra.mxu0 %v201
  %332 = vmatprep.subr.mxu0 0.0
  %333 = vmatpush1.msra.mxu0 %v202
  %334 = vmatprep.subr.mxu0 0.0
  %335 = vmatpush1.msra.mxu0 0.0
  %336 = vmatprep.subr.mxu0 0.0
  %337 = vmatpush1.msra.mxu0 0.0
  %338 = vmatprep.subr.mxu0 0.0
  %339 = vmatpush1.msra.mxu0 0.0
  %340 = vmatprep.subr.mxu0 0.0
  %341 = vmatpush1.msra.mxu0 0.0
  %342 = vmatprep.subr.mxu0 0.0
  %343 = vmatpush1.msra.mxu0 0.0
  %344 = vmatprep.subr.mxu0 0.0
  %345 = vmatpush1.msra.mxu0 0.0
  %346 = vmatprep.subr.mxu0 0.0
  %347 = vmatpush1.msra.mxu0 0.0
  %348 = vmatprep.subr.mxu0 0.0
  %349 = vmatpush1.msra.mxu0 0.0
  %350 = vmatprep.subr.mxu0 0.0
  %351 = vmatpush1.msra.mxu0 0.0
  %352 = vmatprep.subr.mxu0 0.0
  %353 = vmatpush1.msra.mxu0 0.0
  %354 = vmatprep.subr.mxu0 0.0
  %355 = vmatpush1.msra.mxu0 0.0
  %356 = vmatprep.subr.mxu0 0.0
  %357 = vmatpush1.msra.mxu0 0.0
  %358 = vmatprep.subr.mxu0 0.0
  %359 = vmatpush1.msra.mxu0 0.0
  %360 = vmatprep.subr.mxu0 0.0
  %361 = vmatpush1.msra.mxu0 0.0
  %362 = vmatprep.subr.mxu0 0.0
  %363 = vmatpush1.msra.mxu0 0.0
  %364 = vmatprep.subr.mxu0 0.0
  %365 = vmatpush1.msra.mxu0 0.0
  %366 = vmatprep.subr.mxu0 0.0
  %367 = vmatpush1.msra.mxu0 0.0
  %368 = vmatprep.subr.mxu0 0.0
  %369 = vmatpush1.msra.mxu0 0.0
  %370 = vmatprep.subr.mxu0 0.0
  %371 = vmatpush1.msra.mxu0 0.0
  %372 = vmatprep.subr.mxu0 0.0
  %373 = vmatpush1.msra.mxu0 0.0
  %374 = vmatprep.subr.mxu0 0.0
  %375 = vmatpush1.msra.mxu0 0.0
  %376 = vmatprep.subr.mxu0 0.0
  %377 = vmatpush1.msra.mxu0 0.0
  %378 = vmatprep.subr.mxu0 0.0
  %379 = vmatpush1.msra.mxu0 0.0
  %380 = vmatprep.subr.mxu0 0.0
  %381 = vmatpush1.msra.mxu0 0.0
  %382 = vmatprep.subr.mxu0 0.0
  %383 = vmatpush1.msra.mxu0 0.0
  %384 = vmatprep.subr.mxu0 0.0
  %385 = vmatpush1.msra.mxu0 0.0
  %386 = vmatprep.subr.mxu0 0.0
  %387 = vmatpush1.msra.mxu0 0.0
  %388 = vmatprep.subr.mxu0 0.0
  %389 = vmatpush1.msra.mxu0 0.0
  %390 = vmatprep.mubr.f32.mxu0 0.0
  %391 = vmatmul.mubr.f32.gmra.mrb[0].mxu0 %v324
  %v392 = vpop.f32.mrb[0].mxu0
  %v393 = vadd.f32 0.0, %v392
  %v394 = vpop.f32.mrb[0].mxu0
  %395 = vdwg.mxu0
  %v396 = vadd.f32 %v323, %v393
  %v397 = vxor.u32 %v396, 2147483648
  %v398 = vmul.f32 %v397, 1.442695
  %v399 = vpow.pop %v398
  %v400 = vadd.f32 %v399, 1.0
  %v401 = vrcp.pop %v400
  %v402 = vmul.f32 1.0, %v401
  %v403 = vadd.f32 %v393, %v292
  %405 = vrot.lane.b32.xlu0 %v403, 64
  %v406 = vpop.permute.xlu0 %405
  %v408 = vmul.f32 %v402, %v406
  %410 = vrot.lane.b32.xlu0 %v408, 64
  %v411 = vpop.permute.xlu0 %410
  %v413 = vadd.f32 %v323, %v411
  %v414 = vtanh.pop %v413
  %v415 = vsub.f32 %v316, %v414
  %417 = vrot.lane.b32.xlu0 %v415, 96
  %v418 = vpop.permute.xlu0 %417
  %v420 = vmul.f32 %v402, %v418
  %422 = vrot.lane.b32.xlu0 %v420, 32
  %v423 = vpop.permute.xlu0 %422
  %v425 = vadd.f32 %v414, %v423
  %427 = vrot.lane.b32.xlu0 %v425, 64
  %v428 = vpop.permute.xlu0 %427
  %s430 = scalar_lea.vmem [#allocation3], 8
  %431 = vst.msk [vmem:[%s430] sm:$0xff] %vm210, %v428
  %s432 = scalar_lea.vmem [#allocation2], 16
  %v433 = vld [vmem:[%s432] sm:$0xff]
  %v434 = vsel %vm210, %v428, 0
  %436 = vmatprep.subr.mxu0 0.0
  %437 = vmatpush1.msra.mxu0 %v199
  %438 = vmatprep.subr.mxu0 0.0
  %439 = vmatpush1.msra.mxu0 %v200
  %440 = vmatprep.subr.mxu0 0.0
  %441 = vmatpush1.msra.mxu0 %v201
  %442 = vmatprep.subr.mxu0 0.0
  %443 = vmatpush1.msra.mxu0 %v202
  %444 = vmatprep.subr.mxu0 0.0
  %445 = vmatpush1.msra.mxu0 0.0
  %446 = vmatprep.subr.mxu0 0.0
  %447 = vmatpush1.msra.mxu0 0.0
  %448 = vmatprep.subr.mxu0 0.0
  %449 = vmatpush1.msra.mxu0 0.0
  %450 = vmatprep.subr.mxu0 0.0
  %451 = vmatpush1.msra.mxu0 0.0
  %452 = vmatprep.subr.mxu0 0.0
  %453 = vmatpush1.msra.mxu0 0.0
  %454 = vmatprep.subr.mxu0 0.0
  %455 = vmatpush1.msra.mxu0 0.0
  %456 = vmatprep.subr.mxu0 0.0
  %457 = vmatpush1.msra.mxu0 0.0
  %458 = vmatprep.subr.mxu0 0.0
  %459 = vmatpush1.msra.mxu0 0.0
  %460 = vmatprep.subr.mxu0 0.0
  %461 = vmatpush1.msra.mxu0 0.0
  %462 = vmatprep.subr.mxu0 0.0
  %463 = vmatpush1.msra.mxu0 0.0
  %464 = vmatprep.subr.mxu0 0.0
  %465 = vmatpush1.msra.mxu0 0.0
  %466 = vmatprep.subr.mxu0 0.0
  %467 = vmatpush1.msra.mxu0 0.0
  %468 = vmatprep.subr.mxu0 0.0
  %469 = vmatpush1.msra.mxu0 0.0
  %470 = vmatprep.subr.mxu0 0.0
  %471 = vmatpush1.msra.mxu0 0.0
  %472 = vmatprep.subr.mxu0 0.0
  %473 = vmatpush1.msra.mxu0 0.0
  %474 = vmatprep.subr.mxu0 0.0
  %475 = vmatpush1.msra.mxu0 0.0
  %476 = vmatprep.subr.mxu0 0.0
  %477 = vmatpush1.msra.mxu0 0.0
  %478 = vmatprep.subr.mxu0 0.0
  %479 = vmatpush1.msra.mxu0 0.0
  %480 = vmatprep.subr.mxu0 0.0
  %481 = vmatpush1.msra.mxu0 0.0
  %482 = vmatprep.subr.mxu0 0.0
  %483 = vmatpush1.msra.mxu0 0.0
  %484 = vmatprep.subr.mxu0 0.0
  %485 = vmatpush1.msra.mxu0 0.0
  %486 = vmatprep.subr.mxu0 0.0
  %487 = vmatpush1.msra.mxu0 0.0
  %488 = vmatprep.subr.mxu0 0.0
  %489 = vmatpush1.msra.mxu0 0.0
  %490 = vmatprep.subr.mxu0 0.0
  %491 = vmatpush1.msra.mxu0 0.0
  %492 = vmatprep.subr.mxu0 0.0
  %493 = vmatpush1.msra.mxu0 0.0
  %494 = vmatprep.subr.mxu0 0.0
  %495 = vmatpush1.msra.mxu0 0.0
  %496 = vmatprep.subr.mxu0 0.0
  %497 = vmatpush1.msra.mxu0 0.0
  %498 = vmatprep.subr.mxu0 0.0
  %499 = vmatpush1.msra.mxu0 0.0
  %500 = vmatprep.mubr.f32.mxu0 0.0
  %501 = vmatmul.mubr.f32.gmra.mrb[0].mxu0 %v434
  %v502 = vpop.f32.mrb[0].mxu0
  %v503 = vadd.f32 0.0, %v502
  %v504 = vpop.f32.mrb[0].mxu0
  %505 = vdwg.mxu0
  %v506 = vadd.f32 %v433, %v503
  %v507 = vxor.u32 %v506, 2147483648
  %v508 = vmul.f32 %v507, 1.442695
  %v509 = vpow.pop %v508
  %v510 = vadd.f32 %v509, 1.0
  %v511 = vrcp.pop %v510
  %v512 = vmul.f32 1.0, %v511
  %v513 = vadd.f32 %v503, %v292
  %515 = vrot.lane.b32.xlu0 %v513, 64
  %v516 = vpop.permute.xlu0 %515
  %v518 = vmul.f32 %v512, %v516
  %520 = vrot.lane.b32.xlu0 %v518, 64
  %v521 = vpop.permute.xlu0 %520
  %v523 = vadd.f32 %v433, %v521
  %v524 = vtanh.pop %v523
  %v525 = vsub.f32 %v425, %v524
  %527 = vrot.lane.b32.xlu0 %v525, 96
  %v528 = vpop.permute.xlu0 %527
  %v530 = vmul.f32 %v512, %v528
  %532 = vrot.lane.b32.xlu0 %v530, 32
  %v533 = vpop.permute.xlu0 %532
  %v535 = vadd.f32 %v524, %v533
  %537 = vrot.lane.b32.xlu0 %v535, 64
  %v538 = vpop.permute.xlu0 %537
  %s540 = scalar_lea.vmem [#allocation3], 16
  %541 = vst.msk [vmem:[%s540] sm:$0xff] %vm210, %v538
  %s542 = scalar_lea.vmem [#allocation2], 24
  %v543 = vld [vmem:[%s542] sm:$0xff]
  %v544 = vsel %vm210, %v538, 0
  %546 = vmatprep.subr.mxu0 0.0
  %547 = vmatpush1.msra.mxu0 %v199
  %548 = vmatprep.subr.mxu0 0.0
  %549 = vmatpush1.msra.mxu0 %v200
  %550 = vmatprep.subr.mxu0 0.0
  %551 = vmatpush1.msra.mxu0 %v201
  %552 = vmatprep.subr.mxu0 0.0
  %553 = vmatpush1.msra.mxu0 %v202
  %554 = vmatprep.subr.mxu0 0.0
  %555 = vmatpush1.msra.mxu0 0.0
  %556 = vmatprep.subr.mxu0 0.0
  %557 = vmatpush1.msra.mxu0 0.0
  %558 = vmatprep.subr.mxu0 0.0
  %559 = vmatpush1.msra.mxu0 0.0
  %560 = vmatprep.subr.mxu0 0.0
  %561 = vmatpush1.msra.mxu0 0.0
  %562 = vmatprep.subr.mxu0 0.0
  %563 = vmatpush1.msra.mxu0 0.0
  %564 = vmatprep.subr.mxu0 0.0
  %565 = vmatpush1.msra.mxu0 0.0
  %566 = vmatprep.subr.mxu0 0.0
  %567 = vmatpush1.msra.mxu0 0.0
  %568 = vmatprep.subr.mxu0 0.0
  %569 = vmatpush1.msra.mxu0 0.0
  %570 = vmatprep.subr.mxu0 0.0
  %571 = vmatpush1.msra.mxu0 0.0
  %572 = vmatprep.subr.mxu0 0.0
  %573 = vmatpush1.msra.mxu0 0.0
  %574 = vmatprep.subr.mxu0 0.0
  %575 = vmatpush1.msra.mxu0 0.0
  %576 = vmatprep.subr.mxu0 0.0
  %577 = vmatpush1.msra.mxu0 0.0
  %578 = vmatprep.subr.mxu0 0.0
  %579 = vmatpush1.msra.mxu0 0.0
  %580 = vmatprep.subr.mxu0 0.0
  %581 = vmatpush1.msra.mxu0 0.0
  %582 = vmatprep.subr.mxu0 0.0
  %583 = vmatpush1.msra.mxu0 0.0
  %584 = vmatprep.subr.mxu0 0.0
  %585 = vmatpush1.msra.mxu0 0.0
  %586 = vmatprep.subr.mxu0 0.0
  %587 = vmatpush1.msra.mxu0 0.0
  %588 = vmatprep.subr.mxu0 0.0
  %589 = vmatpush1.msra.mxu0 0.0
  %590 = vmatprep.subr.mxu0 0.0
  %591 = vmatpush1.msra.mxu0 0.0
  %592 = vmatprep.subr.mxu0 0.0
  %593 = vmatpush1.msra.mxu0 0.0
  %594 = vmatprep.subr.mxu0 0.0
  %595 = vmatpush1.msra.mxu0 0.0
  %596 = vmatprep.subr.mxu0 0.0
  %597 = vmatpush1.msra.mxu0 0.0
  %598 = vmatprep.subr.mxu0 0.0
  %599 = vmatpush1.msra.mxu0 0.0
  %600 = vmatprep.subr.mxu0 0.0
  %601 = vmatpush1.msra.mxu0 0.0
  %602 = vmatprep.subr.mxu0 0.0
  %603 = vmatpush1.msra.mxu0 0.0
  %604 = vmatprep.subr.mxu0 0.0
  %605 = vmatpush1.msra.mxu0 0.0
  %606 = vmatprep.subr.mxu0 0.0
  %607 = vmatpush1.msra.mxu0 0.0
  %608 = vmatprep.subr.mxu0 0.0
  %609 = vmatpush1.msra.mxu0 0.0
  %610 = vmatprep.mubr.f32.mxu0 0.0
  %611 = vmatmul.mubr.f32.gmra.mrb[0].mxu0 %v544
  %v612 = vpop.f32.mrb[0].mxu0
  %v613 = vadd.f32 0.0, %v612
  %v614 = vpop.f32.mrb[0].mxu0
  %615 = vdwg.mxu0
  %v616 = vadd.f32 %v543, %v613
  %v617 = vxor.u32 %v616, 2147483648
  %v618 = vmul.f32 %v617, 1.442695
  %v619 = vpow.pop %v618
  %v620 = vadd.f32 %v619, 1.0
  %v621 = vrcp.pop %v620
  %v622 = vmul.f32 1.0, %v621
  %v623 = vadd.f32 %v613, %v292
  %625 = vrot.lane.b32.xlu0 %v623, 64
  %v626 = vpop.permute.xlu0 %625
  %v628 = vmul.f32 %v622, %v626
  %630 = vrot.lane.b32.xlu0 %v628, 64
  %v631 = vpop.permute.xlu0 %630
  %v633 = vadd.f32 %v543, %v631
  %v634 = vtanh.pop %v633
  %v635 = vsub.f32 %v535, %v634
  %637 = vrot.lane.b32.xlu0 %v635, 96
  %v638 = vpop.permute.xlu0 %637
  %v640 = vmul.f32 %v622, %v638
  %642 = vrot.lane.b32.xlu0 %v640, 32
  %v643 = vpop.permute.xlu0 %642
  %v645 = vadd.f32 %v634, %v643
  %647 = vrot.lane.b32.xlu0 %v645, 64
  %v648 = vpop.permute.xlu0 %647
  %s650 = scalar_lea.vmem [#allocation3], 24
  %651 = vst.msk [vmem:[%s650] sm:$0xff] %vm210, %v648
  %s652 = scalar_lea.vmem [#allocation2], 32
  %v653 = vld [vmem:[%s652] sm:$0xff]
  %v654 = vsel %vm210, %v648, 0
  %656 = vmatprep.subr.mxu0 0.0
  %657 = vmatpush1.msra.mxu0 %v199
  %658 = vmatprep.subr.mxu0 0.0
  %659 = vmatpush1.msra.mxu0 %v200
  %660 = vmatprep.subr.mxu0 0.0
  %661 = vmatpush1.msra.mxu0 %v201
  %662 = vmatprep.subr.mxu0 0.0
  %663 = vmatpush1.msra.mxu0 %v202
  %664 = vmatprep.subr.mxu0 0.0
  %665 = vmatpush1.msra.mxu0 0.0
  %666 = vmatprep.subr.mxu0 0.0
  %667 = vmatpush1.msra.mxu0 0.0
  %668 = vmatprep.subr.mxu0 0.0
  %669 = vmatpush1.msra.mxu0 0.0
  %670 = vmatprep.subr.mxu0 0.0
  %671 = vmatpush1.msra.mxu0 0.0
  %672 = vmatprep.subr.mxu0 0.0
  %673 = vmatpush1.msra.mxu0 0.0
  %674 = vmatprep.subr.mxu0 0.0
  %675 = vmatpush1.msra.mxu0 0.0
  %676 = vmatprep.subr.mxu0 0.0
  %677 = vmatpush1.msra.mxu0 0.0
  %678 = vmatprep.subr.mxu0 0.0
  %679 = vmatpush1.msra.mxu0 0.0
  %680 = vmatprep.subr.mxu0 0.0
  %681 = vmatpush1.msra.mxu0 0.0
  %682 = vmatprep.subr.mxu0 0.0
  %683 = vmatpush1.msra.mxu0 0.0
  %684 = vmatprep.subr.mxu0 0.0
  %685 = vmatpush1.msra.mxu0 0.0
  %686 = vmatprep.subr.mxu0 0.0
  %687 = vmatpush1.msra.mxu0 0.0
  %688 = vmatprep.subr.mxu0 0.0
  %689 = vmatpush1.msra.mxu0 0.0
  %690 = vmatprep.subr.mxu0 0.0
  %691 = vmatpush1.msra.mxu0 0.0
  %692 = vmatprep.subr.mxu0 0.0
  %693 = vmatpush1.msra.mxu0 0.0
  %694 = vmatprep.subr.mxu0 0.0
  %695 = vmatpush1.msra.mxu0 0.0
  %696 = vmatprep.subr.mxu0 0.0
  %697 = vmatpush1.msra.mxu0 0.0
  %698 = vmatprep.subr.mxu0 0.0
  %699 = vmatpush1.msra.mxu0 0.0
  %700 = vmatprep.subr.mxu0 0.0
  %701 = vmatpush1.msra.mxu0 0.0
  %702 = vmatprep.subr.mxu0 0.0
  %703 = vmatpush1.msra.mxu0 0.0
  %704 = vmatprep.subr.mxu0 0.0
  %705 = vmatpush1.msra.mxu0 0.0
  %706 = vmatprep.subr.mxu0 0.0
  %707 = vmatpush1.msra.mxu0 0.0
  %708 = vmatprep.subr.mxu0 0.0
  %709 = vmatpush1.msra.mxu0 0.0
  %710 = vmatprep.subr.mxu0 0.0
  %711 = vmatpush1.msra.mxu0 0.0
  %712 = vmatprep.subr.mxu0 0.0
  %713 = vmatpush1.msra.mxu0 0.0
  %714 = vmatprep.subr.mxu0 0.0
  %715 = vmatpush1.msra.mxu0 0.0
  %716 = vmatprep.subr.mxu0 0.0
  %717 = vmatpush1.msra.mxu0 0.0
  %718 = vmatprep.subr.mxu0 0.0
  %719 = vmatpush1.msra.mxu0 0.0
  %720 = vmatprep.mubr.f32.mxu0 0.0
  %721 = vmatmul.mubr.f32.gmra.mrb[0].mxu0 %v654
  %v722 = vpop.f32.mrb[0].mxu0
  %v723 = vadd.f32 0.0, %v722
  %v724 = vpop.f32.mrb[0].mxu0
  %725 = vdwg.mxu0
  %v726 = vadd.f32 %v653, %v723
  %v727 = vxor.u32 %v726, 2147483648
  %v728 = vmul.f32 %v727, 1.442695
  %v729 = vpow.pop %v728
  %v730 = vadd.f32 %v729, 1.0
  %v731 = vrcp.pop %v730
  %v732 = vmul.f32 1.0, %v731
  %v733 = vadd.f32 %v723, %v292
  %735 = vrot.lane.b32.xlu0 %v733, 64
  %v736 = vpop.permute.xlu0 %735
  %v738 = vmul.f32 %v732, %v736
  %740 = vrot.lane.b32.xlu0 %v738, 64
  %v741 = vpop.permute.xlu0 %740
  %v743 = vadd.f32 %v653, %v741
  %v744 = vtanh.pop %v743
  %v745 = vsub.f32 %v645, %v744
  %747 = vrot.lane.b32.xlu0 %v745, 96
  %v748 = vpop.permute.xlu0 %747
  %v750 = vmul.f32 %v732, %v748
  %752 = vrot.lane.b32.xlu0 %v750, 32
  %v753 = vpop.permute.xlu0 %752
  %v755 = vadd.f32 %v744, %v753
  %757 = vrot.lane.b32.xlu0 %v755, 64
  %v758 = vpop.permute.xlu0 %757
  %s760 = scalar_lea.vmem [#allocation3], 32
  %761 = vst.msk [vmem:[%s760] sm:$0xff] %vm210, %v758
  %s762 = scalar_lea.vmem [#allocation2], 40
  %v763 = vld [vmem:[%s762] sm:$0xff]
  %v764 = vsel %vm210, %v758, 0
  %766 = vmatprep.subr.mxu0 0.0
  %767 = vmatpush1.msra.mxu0 %v199
  %768 = vmatprep.subr.mxu0 0.0
  %769 = vmatpush1.msra.mxu0 %v200
  %770 = vmatprep.subr.mxu0 0.0
  %771 = vmatpush1.msra.mxu0 %v201
  %772 = vmatprep.subr.mxu0 0.0
  %773 = vmatpush1.msra.mxu0 %v202
  %774 = vmatprep.subr.mxu0 0.0
  %775 = vmatpush1.msra.mxu0 0.0
  %776 = vmatprep.subr.mxu0 0.0
  %777 = vmatpush1.msra.mxu0 0.0
  %778 = vmatprep.subr.mxu0 0.0
  %779 = vmatpush1.msra.mxu0 0.0
  %780 = vmatprep.subr.mxu0 0.0
  %781 = vmatpush1.msra.mxu0 0.0
  %782 = vmatprep.subr.mxu0 0.0
  %783 = vmatpush1.msra.mxu0 0.0
  %784 = vmatprep.subr.mxu0 0.0
  %785 = vmatpush1.msra.mxu0 0.0
  %786 = vmatprep.subr.mxu0 0.0
  %787 = vmatpush1.msra.mxu0 0.0
  %788 = vmatprep.subr.mxu0 0.0
  %789 = vmatpush1.msra.mxu0 0.0
  %790 = vmatprep.subr.mxu0 0.0
  %791 = vmatpush1.msra.mxu0 0.0
  %792 = vmatprep.subr.mxu0 0.0
  %793 = vmatpush1.msra.mxu0 0.0
  %794 = vmatprep.subr.mxu0 0.0
  %795 = vmatpush1.msra.mxu0 0.0
  %796 = vmatprep.subr.mxu0 0.0
  %797 = vmatpush1.msra.mxu0 0.0
  %798 = vmatprep.subr.mxu0 0.0
  %799 = vmatpush1.msra.mxu0 0.0
  %800 = vmatprep.subr.mxu0 0.0
  %801 = vmatpush1.msra.mxu0 0.0
  %802 = vmatprep.subr.mxu0 0.0
  %803 = vmatpush1.msra.mxu0 0.0
  %804 = vmatprep.subr.mxu0 0.0
  %805 = vmatpush1.msra.mxu0 0.0
  %806 = vmatprep.subr.mxu0 0.0
  %807 = vmatpush1.msra.mxu0 0.0
  %808 = vmatprep.subr.mxu0 0.0
  %809 = vmatpush1.msra.mxu0 0.0
  %810 = vmatprep.subr.mxu0 0.0
  %811 = vmatpush1.msra.mxu0 0.0
  %812 = vmatprep.subr.mxu0 0.0
  %813 = vmatpush1.msra.mxu0 0.0
  %814 = vmatprep.subr.mxu0 0.0
  %815 = vmatpush1.msra.mxu0 0.0
  %816 = vmatprep.subr.mxu0 0.0
  %817 = vmatpush1.msra.mxu0 0.0
  %818 = vmatprep.subr.mxu0 0.0
  %819 = vmatpush1.msra.mxu0 0.0
  %820 = vmatprep.subr.mxu0 0.0
  %821 = vmatpush1.msra.mxu0 0.0
  %822 = vmatprep.subr.mxu0 0.0
  %823 = vmatpush1.msra.mxu0 0.0
  %824 = vmatprep.subr.mxu0 0.0
  %825 = vmatpush1.msra.mxu0 0.0
  %826 = vmatprep.subr.mxu0 0.0
  %827 = vmatpush1.msra.mxu0 0.0
  %828 = vmatprep.subr.mxu0 0.0
  %829 = vmatpush1.msra.mxu0 0.0
  %830 = vmatprep.mubr.f32.mxu0 0.0
  %831 = vmatmul.mubr.f32.gmra.mrb[0].mxu0 %v764
  %v832 = vpop.f32.mrb[0].mxu0
  %v833 = vadd.f32 0.0, %v832
  %v834 = vpop.f32.mrb[0].mxu0
  %835 = vdwg.mxu0
  %v836 = vadd.f32 %v763, %v833
  %v837 = vxor.u32 %v836, 2147483648
  %v838 = vmul.f32 %v837, 1.442695
  %v839 = vpow.pop %v838
  %v840 = vadd.f32 %v839, 1.0
  %v841 = vrcp.pop %v840
  %v842 = vmul.f32 1.0, %v841
  %v843 = vadd.f32 %v833, %v292
  %845 = vrot.lane.b32.xlu0 %v843, 64
  %v846 = vpop.permute.xlu0 %845
  %v848 = vmul.f32 %v842, %v846
  %850 = vrot.lane.b32.xlu0 %v848, 64
  %v851 = vpop.permute.xlu0 %850
  %v853 = vadd.f32 %v763, %v851
  %v854 = vtanh.pop %v853
  %v855 = vsub.f32 %v755, %v854
  %857 = vrot.lane.b32.xlu0 %v855, 96
  %v858 = vpop.permute.xlu0 %857
  %v860 = vmul.f32 %v842, %v858
  %862 = vrot.lane.b32.xlu0 %v860, 32
  %v863 = vpop.permute.xlu0 %862
  %v865 = vadd.f32 %v854, %v863
  %867 = vrot.lane.b32.xlu0 %v865, 64
  %v868 = vpop.permute.xlu0 %867
  %s870 = scalar_lea.vmem [#allocation3], 40
  %871 = vst.msk [vmem:[%s870] sm:$0xff] %vm210, %v868
  %s872 = scalar_lea.vmem [#allocation2], 48
  %v873 = vld [vmem:[%s872] sm:$0xff]
  %v874 = vsel %vm210, %v868, 0
  %876 = vmatprep.subr.mxu0 0.0
  %877 = vmatpush1.msra.mxu0 %v199
  %878 = vmatprep.subr.mxu0 0.0
  %879 = vmatpush1.msra.mxu0 %v200
  %880 = vmatprep.subr.mxu0 0.0
  %881 = vmatpush1.msra.mxu0 %v201
  %882 = vmatprep.subr.mxu0 0.0
  %883 = vmatpush1.msra.mxu0 %v202
  %884 = vmatprep.subr.mxu0 0.0
  %885 = vmatpush1.msra.mxu0 0.0
  %886 = vmatprep.subr.mxu0 0.0
  %887 = vmatpush1.msra.mxu0 0.0
  %888 = vmatprep.subr.mxu0 0.0
  %889 = vmatpush1.msra.mxu0 0.0
  %890 = vmatprep.subr.mxu0 0.0
  %891 = vmatpush1.msra.mxu0 0.0
  %892 = vmatprep.subr.mxu0 0.0
  %893 = vmatpush1.msra.mxu0 0.0
  %894 = vmatprep.subr.mxu0 0.0
  %895 = vmatpush1.msra.mxu0 0.0
  %896 = vmatprep.subr.mxu0 0.0
  %897 = vmatpush1.msra.mxu0 0.0
  %898 = vmatprep.subr.mxu0 0.0
  %899 = vmatpush1.msra.mxu0 0.0
  %900 = vmatprep.subr.mxu0 0.0
  %901 = vmatpush1.msra.mxu0 0.0
  %902 = vmatprep.subr.mxu0 0.0
  %903 = vmatpush1.msra.mxu0 0.0
  %904 = vmatprep.subr.mxu0 0.0
  %905 = vmatpush1.msra.mxu0 0.0
  %906 = vmatprep.subr.mxu0 0.0
  %907 = vmatpush1.msra.mxu0 0.0
  %908 = vmatprep.subr.mxu0 0.0
  %909 = vmatpush1.msra.mxu0 0.0
  %910 = vmatprep.subr.mxu0 0.0
  %911 = vmatpush1.msra.mxu0 0.0
  %912 = vmatprep.subr.mxu0 0.0
  %913 = vmatpush1.msra.mxu0 0.0
  %914 = vmatprep.subr.mxu0 0.0
  %915 = vmatpush1.msra.mxu0 0.0
  %916 = vmatprep.subr.mxu0 0.0
  %917 = vmatpush1.msra.mxu0 0.0
  %918 = vmatprep.subr.mxu0 0.0
  %919 = vmatpush1.msra.mxu0 0.0
  %920 = vmatprep.subr.mxu0 0.0
  %921 = vmatpush1.msra.mxu0 0.0
  %922 = vmatprep.subr.mxu0 0.0
  %923 = vmatpush1.msra.mxu0 0.0
  %924 = vmatprep.subr.mxu0 0.0
  %925 = vmatpush1.msra.mxu0 0.0
  %926 = vmatprep.subr.mxu0 0.0
  %927 = vmatpush1.msra.mxu0 0.0
  %928 = vmatprep.subr.mxu0 0.0
  %929 = vmatpush1.msra.mxu0 0.0
  %930 = vmatprep.subr.mxu0 0.0
  %931 = vmatpush1.msra.mxu0 0.0
  %932 = vmatprep.subr.mxu0 0.0
  %933 = vmatpush1.msra.mxu0 0.0
  %934 = vmatprep.subr.mxu0 0.0
  %935 = vmatpush1.msra.mxu0 0.0
  %936 = vmatprep.subr.mxu0 0.0
  %937 = vmatpush1.msra.mxu0 0.0
  %938 = vmatprep.subr.mxu0 0.0
  %939 = vmatpush1.msra.mxu0 0.0
  %940 = vmatprep.mubr.f32.mxu0 0.0
  %941 = vmatmul.mubr.f32.gmra.mrb[0].mxu0 %v874
  %v942 = vpop.f32.mrb[0].mxu0
  %v943 = vadd.f32 0.0, %v942
  %v944 = vpop.f32.mrb[0].mxu0
  %945 = vdwg.mxu0
  %v946 = vadd.f32 %v873, %v943
  %v947 = vxor.u32 %v946, 2147483648
  %v948 = vmul.f32 %v947, 1.442695
  %v949 = vpow.pop %v948
  %v950 = vadd.f32 %v949, 1.0
  %v951 = vrcp.pop %v950
  %v952 = vmul.f32 1.0, %v951
  %v953 = vadd.f32 %v943, %v292
  %955 = vrot.lane.b32.xlu0 %v953, 64
  %v956 = vpop.permute.xlu0 %955
  %v958 = vmul.f32 %v952, %v956
  %960 = vrot.lane.b32.xlu0 %v958, 64
  %v961 = vpop.permute.xlu0 %960
  %v963 = vadd.f32 %v873, %v961
  %v964 = vtanh.pop %v963
  %v965 = vsub.f32 %v865, %v964
  %967 = vrot.lane.b32.xlu0 %v965, 96
  %v968 = vpop.permute.xlu0 %967
  %v970 = vmul.f32 %v952, %v968
  %972 = vrot.lane.b32.xlu0 %v970, 32
  %v973 = vpop.permute.xlu0 %972
  %v975 = vadd.f32 %v964, %v973
  %977 = vrot.lane.b32.xlu0 %v975, 64
  %v978 = vpop.permute.xlu0 %977
  %s980 = scalar_lea.vmem [#allocation3], 48
  %981 = vst.msk [vmem:[%s980] sm:$0xff] %vm210, %v978
  %s982 = scalar_lea.vmem [#allocation2], 56
  %v983 = vld [vmem:[%s982] sm:$0xff]
  %v984 = vsel %vm210, %v978, 0
  %986 = vmatprep.subr.mxu0 0.0
  %987 = vmatpush1.msra.mxu0 %v199
  %988 = vmatprep.subr.mxu0 0.0
  %989 = vmatpush1.msra.mxu0 %v200
  %990 = vmatprep.subr.mxu0 0.0
  %991 = vmatpush1.msra.mxu0 %v201
  %992 = vmatprep.subr.mxu0 0.0
  %993 = vmatpush1.msra.mxu0 %v202
  %994 = vmatprep.subr.mxu0 0.0
  %995 = vmatpush1.msra.mxu0 0.0
  %996 = vmatprep.subr.mxu0 0.0
  %997 = vmatpush1.msra.mxu0 0.0
  %998 = vmatprep.subr.mxu0 0.0
  %999 = vmatpush1.msra.mxu0 0.0
  %1000 = vmatprep.subr.mxu0 0.0
  %1001 = vmatpush1.msra.mxu0 0.0
  %1002 = vmatprep.subr.mxu0 0.0
  %1003 = vmatpush1.msra.mxu0 0.0
  %1004 = vmatprep.subr.mxu0 0.0
  %1005 = vmatpush1.msra.mxu0 0.0
  %1006 = vmatprep.subr.mxu0 0.0
  %1007 = vmatpush1.msra.mxu0 0.0
  %1008 = vmatprep.subr.mxu0 0.0
  %1009 = vmatpush1.msra.mxu0 0.0
  %1010 = vmatprep.subr.mxu0 0.0
  %1011 = vmatpush1.msra.mxu0 0.0
  %1012 = vmatprep.subr.mxu0 0.0
  %1013 = vmatpush1.msra.mxu0 0.0
  %1014 = vmatprep.subr.mxu0 0.0
  %1015 = vmatpush1.msra.mxu0 0.0
  %1016 = vmatprep.subr.mxu0 0.0
  %1017 = vmatpush1.msra.mxu0 0.0
  %1018 = vmatprep.subr.mxu0 0.0
  %1019 = vmatpush1.msra.mxu0 0.0
  %1020 = vmatprep.subr.mxu0 0.0
  %1021 = vmatpush1.msra.mxu0 0.0
  %1022 = vmatprep.subr.mxu0 0.0
  %1023 = vmatpush1.msra.mxu0 0.0
  %1024 = vmatprep.subr.mxu0 0.0
  %1025 = vmatpush1.msra.mxu0 0.0
  %1026 = vmatprep.subr.mxu0 0.0
  %1027 = vmatpush1.msra.mxu0 0.0
  %1028 = vmatprep.subr.mxu0 0.0
  %1029 = vmatpush1.msra.mxu0 0.0
  %1030 = vmatprep.subr.mxu0 0.0
  %1031 = vmatpush1.msra.mxu0 0.0
  %1032 = vmatprep.subr.mxu0 0.0
  %1033 = vmatpush1.msra.mxu0 0.0
  %1034 = vmatprep.subr.mxu0 0.0
  %1035 = vmatpush1.msra.mxu0 0.0
  %1036 = vmatprep.subr.mxu0 0.0
  %1037 = vmatpush1.msra.mxu0 0.0
  %1038 = vmatprep.subr.mxu0 0.0
  %1039 = vmatpush1.msra.mxu0 0.0
  %1040 = vmatprep.subr.mxu0 0.0
  %1041 = vmatpush1.msra.mxu0 0.0
  %1042 = vmatprep.subr.mxu0 0.0
  %1043 = vmatpush1.msra.mxu0 0.0
  %1044 = vmatprep.subr.mxu0 0.0
  %1045 = vmatpush1.msra.mxu0 0.0
  %1046 = vmatprep.subr.mxu0 0.0
  %1047 = vmatpush1.msra.mxu0 0.0
  %1048 = vmatprep.subr.mxu0 0.0
  %1049 = vmatpush1.msra.mxu0 0.0
  %1050 = vmatprep.mubr.f32.mxu0 0.0
  %1051 = vmatmul.mubr.f32.gmra.mrb[0].mxu0 %v984
  %v1052 = vpop.f32.mrb[0].mxu0
  %v1053 = vadd.f32 0.0, %v1052
  %v1054 = vpop.f32.mrb[0].mxu0
  %1055 = vdwg.mxu0
  %v1056 = vadd.f32 %v983, %v1053
  %v1057 = vxor.u32 %v1056, 2147483648
  %v1058 = vmul.f32 %v1057, 1.442695
  %v1059 = vpow.pop %v1058
  %v1060 = vadd.f32 %v1059, 1.0
  %v1061 = vrcp.pop %v1060
  %v1062 = vmul.f32 1.0, %v1061
  %v1063 = vadd.f32 %v1053, %v292
  %1065 = vrot.lane.b32.xlu0 %v1063, 64
  %v1066 = vpop.permute.xlu0 %1065
  %v1068 = vmul.f32 %v1062, %v1066
  %1070 = vrot.lane.b32.xlu0 %v1068, 64
  %v1071 = vpop.permute.xlu0 %1070
  %v1073 = vadd.f32 %v983, %v1071
  %v1074 = vtanh.pop %v1073
  %v1075 = vsub.f32 %v975, %v1074
  %1077 = vrot.lane.b32.xlu0 %v1075, 96
  %v1078 = vpop.permute.xlu0 %1077
  %v1080 = vmul.f32 %v1062, %v1078
  %1082 = vrot.lane.b32.xlu0 %v1080, 32
  %v1083 = vpop.permute.xlu0 %1082
  %v1085 = vadd.f32 %v1074, %v1083
  %1087 = vrot.lane.b32.xlu0 %v1085, 64
  %v1088 = vpop.permute.xlu0 %1087
  %s1090 = scalar_lea.vmem [#allocation3], 56
  %1091 = vst.msk [vmem:[%s1090] sm:$0xff] %vm210, %v1088
  %v1092 = vld [vmem:[#allocation3] sm:$0xff]
  %v1093 = vld [vmem:[#allocation3 + $0x8] sm:$0xff]
  %v1094 = vld [vmem:[#allocation3 + $0x10] sm:$0xff]
  %v1095 = vld [vmem:[#allocation3 + $0x18] sm:$0xff]
  %v1096 = vld [vmem:[#allocation3 + $0x20] sm:$0xff]
  %v1097 = vld [vmem:[#allocation3 + $0x28] sm:$0xff]
  %v1098 = vld [vmem:[#allocation3 + $0x30] sm:$0xff]
  %v1099 = vld [vmem:[#allocation3 + $0x38] sm:$0xff]
  %v1100 = vld [vmem:[%s5] sm:$0xff]
  %v1101 = vld [vmem:[%s5 + $0x8] sm:$0xff]
  %v1102 = vld [vmem:[%s5 + $0x10] sm:$0xff]
  %v1103 = vld [vmem:[%s5 + $0x18] sm:$0xff]
  %v1104 = vld [vmem:[%s7] sm:$0x1]
  %v1106 = vlaneseq
  %v1107 = vshrl.u32 %v1106, 7
  %v1108 = vsub.s32 0, %v1107
  %v1109 = vrot.slane %v1104, %v1108
  %v1112 = vsel %vm210, %v1092, 0
  %v1115 = vsel %vm210, %v1093, 0
  %v1118 = vsel %vm210, %v1094, 0
  %v1121 = vsel %vm210, %v1095, 0
  %v1124 = vsel %vm210, %v1096, 0
  %v1127 = vsel %vm210, %v1097, 0
  %v1130 = vsel %vm210, %v1098, 0
  %v1133 = vsel %vm210, %v1099, 0
  %1135 = vmatprep.subr.mxu0 0.0
  %1136 = vmatpush1.msra.mxu0 %v1100
  %1137 = vmatprep.subr.mxu0 0.0
  %1138 = vmatpush1.msra.mxu0 %v1101
  %1139 = vmatprep.subr.mxu0 0.0
  %1140 = vmatpush1.msra.mxu0 %v1102
  %1141 = vmatprep.subr.mxu0 0.0
  %1142 = vmatpush1.msra.mxu0 %v1103
  %1143 = vmatprep.subr.mxu0 0.0
  %1144 = vmatpush1.msra.mxu0 0.0
  %1145 = vmatprep.subr.mxu0 0.0
  %1146 = vmatpush1.msra.mxu0 0.0
  %1147 = vmatprep.subr.mxu0 0.0
  %1148 = vmatpush1.msra.mxu0 0.0
  %1149 = vmatprep.subr.mxu0 0.0
  %1150 = vmatpush1.msra.mxu0 0.0
  %1151 = vmatprep.subr.mxu0 0.0
  %1152 = vmatpush1.msra.mxu0 0.0
  %1153 = vmatprep.subr.mxu0 0.0
  %1154 = vmatpush1.msra.mxu0 0.0
  %1155 = vmatprep.subr.mxu0 0.0
  %1156 = vmatpush1.msra.mxu0 0.0
  %1157 = vmatprep.subr.mxu0 0.0
  %1158 = vmatpush1.msra.mxu0 0.0
  %1159 = vmatprep.subr.mxu0 0.0
  %1160 = vmatpush1.msra.mxu0 0.0
  %1161 = vmatprep.subr.mxu0 0.0
  %1162 = vmatpush1.msra.mxu0 0.0
  %1163 = vmatprep.subr.mxu0 0.0
  %1164 = vmatpush1.msra.mxu0 0.0
  %1165 = vmatprep.subr.mxu0 0.0
  %1166 = vmatpush1.msra.mxu0 0.0
  %1167 = vmatprep.subr.mxu0 0.0
  %1168 = vmatpush1.msra.mxu0 0.0
  %1169 = vmatprep.subr.mxu0 0.0
  %1170 = vmatpush1.msra.mxu0 0.0
  %1171 = vmatprep.subr.mxu0 0.0
  %1172 = vmatpush1.msra.mxu0 0.0
  %1173 = vmatprep.subr.mxu0 0.0
  %1174 = vmatpush1.msra.mxu0 0.0
  %1175 = vmatprep.subr.mxu0 0.0
  %1176 = vmatpush1.msra.mxu0 0.0
  %1177 = vmatprep.subr.mxu0 0.0
  %1178 = vmatpush1.msra.mxu0 0.0
  %1179 = vmatprep.subr.mxu0 0.0
  %1180 = vmatpush1.msra.mxu0 0.0
  %1181 = vmatprep.subr.mxu0 0.0
  %1182 = vmatpush1.msra.mxu0 0.0
  %1183 = vmatprep.subr.mxu0 0.0
  %1184 = vmatpush1.msra.mxu0 0.0
  %1185 = vmatprep.subr.mxu0 0.0
  %1186 = vmatpush1.msra.mxu0 0.0
  %1187 = vmatprep.subr.mxu0 0.0
  %1188 = vmatpush1.msra.mxu0 0.0
  %1189 = vmatprep.subr.mxu0 0.0
  %1190 = vmatpush1.msra.mxu0 0.0
  %1191 = vmatprep.subr.mxu0 0.0
  %1192 = vmatpush1.msra.mxu0 0.0
  %1193 = vmatprep.subr.mxu0 0.0
  %1194 = vmatpush1.msra.mxu0 0.0
  %1195 = vmatprep.subr.mxu0 0.0
  %1196 = vmatpush1.msra.mxu0 0.0
  %1197 = vmatprep.subr.mxu0 0.0
  %1198 = vmatpush1.msra.mxu0 0.0
  %1199 = vmatprep.mubr.f32.mxu0 0.0
  %1200 = vmatmul.mubr.f32.gmra.mrb[0].mxu0 %v1112
  %v1201 = vpop.f32.mrb[0].mxu0
  %v1202 = vadd.f32 %v1109, %v1201
  %v1203 = vpop.f32.mrb[0].mxu0
  %1204 = vmatprep.mubr.f32.mxu0 0.0
  %1205 = vmatmul.mubr.f32.gmra.mrb[0].mxu0 %v1115
  %v1206 = vpop.f32.mrb[0].mxu0
  %v1207 = vadd.f32 %v1109, %v1206
  %v1208 = vpop.f32.mrb[0].mxu0
  %1209 = vmatprep.mubr.f32.mxu0 0.0
  %1210 = vmatmul.mubr.f32.gmra.mrb[0].mxu0 %v1118
  %v1211 = vpop.f32.mrb[0].mxu0
  %v1212 = vadd.f32 %v1109, %v1211
  %v1213 = vpop.f32.mrb[0].mxu0
  %1214 = vmatprep.mubr.f32.mxu0 0.0
  %1215 = vmatmul.mubr.f32.gmra.mrb[0].mxu0 %v1121
  %v1216 = vpop.f32.mrb[0].mxu0
  %v1217 = vadd.f32 %v1109, %v1216
  %v1218 = vpop.f32.mrb[0].mxu0
  %1219 = vmatprep.mubr.f32.mxu0 0.0
  %1220 = vmatmul.mubr.f32.gmra.mrb[0].mxu0 %v1124
  %v1221 = vpop.f32.mrb[0].mxu0
  %v1222 = vadd.f32 %v1109, %v1221
  %v1223 = vpop.f32.mrb[0].mxu0
  %1224 = vmatprep.mubr.f32.mxu0 0.0
  %1225 = vmatmul.mubr.f32.gmra.mrb[0].mxu0 %v1127
  %v1226 = vpop.f32.mrb[0].mxu0
  %v1227 = vadd.f32 %v1109, %v1226
  %v1228 = vpop.f32.mrb[0].mxu0
  %1229 = vmatprep.mubr.f32.mxu0 0.0
  %1230 = vmatmul.mubr.f32.gmra.mrb[0].mxu0 %v1130
  %v1231 = vpop.f32.mrb[0].mxu0
  %v1232 = vadd.f32 %v1109, %v1231
  %v1233 = vpop.f32.mrb[0].mxu0
  %1234 = vmatprep.mubr.f32.mxu0 0.0
  %1235 = vmatmul.mubr.f32.gmra.mrb[0].mxu0 %v1133
  %v1236 = vpop.f32.mrb[0].mxu0
  %v1237 = vadd.f32 %v1109, %v1236
  %v1238 = vpop.f32.mrb[0].mxu0
  %1239 = vdwg.mxu0
  %1240 = vst.msk [vmem:[#allocation2] sm:$0xff] %vm190, %v1202
  %1241 = vst.msk [vmem:[#allocation2 + $0x8] sm:$0xff] %vm190, %v1207
  %1242 = vst.msk [vmem:[#allocation2 + $0x10] sm:$0xff] %vm190, %v1212
  %1243 = vst.msk [vmem:[#allocation2 + $0x18] sm:$0xff] %vm190, %v1217
  %1244 = vst.msk [vmem:[#allocation2 + $0x20] sm:$0xff] %vm190, %v1222
  %1245 = vst.msk [vmem:[#allocation2 + $0x28] sm:$0xff] %vm190, %v1227
  %1246 = vst.msk [vmem:[#allocation2 + $0x30] sm:$0xff] %vm190, %v1232
  %1247 = vst.msk [vmem:[#allocation2 + $0x38] sm:$0xff] %vm190, %v1237
  %v1248 = vld [vmem:[%s6] sm:$0xff]
  %v1249 = vld [vmem:[%s6 + $0x8] sm:$0xff]
  %v1250 = vld [vmem:[%s6 + $0x10] sm:$0xff]
  %v1251 = vld [vmem:[%s6 + $0x18] sm:$0xff]
  %v1252 = vld [vmem:[%s8] sm:$0x1]
  %v1254 = vlaneseq
  %v1255 = vshrl.u32 %v1254, 7
  %v1256 = vsub.s32 0, %v1255
  %v1257 = vrot.slane %v1252, %v1256
  %v1258 = vld [vmem:[#allocation2] sm:$0xff]
  %1259 = vmatprep.subr.mxu0 0.0
  %1260 = vmatpush1.msra.mxu0 %v1248
  %1261 = vmatprep.subr.mxu0 0.0
  %1262 = vmatpush1.msra.mxu0 %v1249
  %1263 = vmatprep.subr.mxu0 0.0
  %1264 = vmatpush1.msra.mxu0 %v1250
  %1265 = vmatprep.subr.mxu0 0.0
  %1266 = vmatpush1.msra.mxu0 %v1251
  %1267 = vmatprep.subr.mxu0 0.0
  %1268 = vmatpush1.msra.mxu0 0.0
  %1269 = vmatprep.subr.mxu0 0.0
  %1270 = vmatpush1.msra.mxu0 0.0
  %1271 = vmatprep.subr.mxu0 0.0
  %1272 = vmatpush1.msra.mxu0 0.0
  %1273 = vmatprep.subr.mxu0 0.0
  %1274 = vmatpush1.msra.mxu0 0.0
  %1275 = vmatprep.subr.mxu0 0.0
  %1276 = vmatpush1.msra.mxu0 0.0
  %1277 = vmatprep.subr.mxu0 0.0
  %1278 = vmatpush1.msra.mxu0 0.0
  %1279 = vmatprep.subr.mxu0 0.0
  %1280 = vmatpush1.msra.mxu0 0.0
  %1281 = vmatprep.subr.mxu0 0.0
  %1282 = vmatpush1.msra.mxu0 0.0
  %1283 = vmatprep.subr.mxu0 0.0
  %1284 = vmatpush1.msra.mxu0 0.0
  %1285 = vmatprep.subr.mxu0 0.0
  %1286 = vmatpush1.msra.mxu0 0.0
  %1287 = vmatprep.subr.mxu0 0.0
  %1288 = vmatpush1.msra.mxu0 0.0
  %1289 = vmatprep.subr.mxu0 0.0
  %1290 = vmatpush1.msra.mxu0 0.0
  %1291 = vmatprep.subr.mxu0 0.0
  %1292 = vmatpush1.msra.mxu0 0.0
  %1293 = vmatprep.subr.mxu0 0.0
  %1294 = vmatpush1.msra.mxu0 0.0
  %1295 = vmatprep.subr.mxu0 0.0
  %1296 = vmatpush1.msra.mxu0 0.0
  %1297 = vmatprep.subr.mxu0 0.0
  %1298 = vmatpush1.msra.mxu0 0.0
  %1299 = vmatprep.subr.mxu0 0.0
  %1300 = vmatpush1.msra.mxu0 0.0
  %1301 = vmatprep.subr.mxu0 0.0
  %1302 = vmatpush1.msra.mxu0 0.0
  %1303 = vmatprep.subr.mxu0 0.0
  %1304 = vmatpush1.msra.mxu0 0.0
  %1305 = vmatprep.subr.mxu0 0.0
  %1306 = vmatpush1.msra.mxu0 0.0
  %1307 = vmatprep.subr.mxu0 0.0
  %1308 = vmatpush1.msra.mxu0 0.0
  %1309 = vmatprep.subr.mxu0 0.0
  %1310 = vmatpush1.msra.mxu0 0.0
  %1311 = vmatprep.subr.mxu0 0.0
  %1312 = vmatpush1.msra.mxu0 0.0
  %1313 = vmatprep.subr.mxu0 0.0
  %1314 = vmatpush1.msra.mxu0 0.0
  %1315 = vmatprep.subr.mxu0 0.0
  %1316 = vmatpush1.msra.mxu0 0.0
  %1317 = vmatprep.subr.mxu0 0.0
  %1318 = vmatpush1.msra.mxu0 0.0
  %1319 = vmatprep.subr.mxu0 0.0
  %1320 = vmatpush1.msra.mxu0 0.0
  %1321 = vmatprep.subr.mxu0 0.0
  %1322 = vmatpush1.msra.mxu0 0.0
  %1323 = vmatprep.mubr.f32.mxu0 0.0
  %1324 = vmatmul.mubr.f32.gmra.mrb[0].mxu0 %v212
  %v1325 = vpop.f32.mrb[0].mxu0
  %v1326 = vadd.f32 0.0, %v1325
  %v1327 = vpop.f32.mrb[0].mxu0
  %1328 = vdwg.mxu0
  %v1329 = vadd.f32 %v1258, %v1326
  %v1330 = vxor.u32 %v1329, 2147483648
  %v1331 = vmul.f32 %v1330, 1.442695
  %v1332 = vpow.pop %v1331
  %v1333 = vadd.f32 %v1332, 1.0
  %v1334 = vrcp.pop %v1333
  %v1335 = vmul.f32 1.0, %v1334
  %1336 = vrot.lane.b32.xlu0 %v1257, 64
  %v1337 = vpop.permute.xlu0 %1336
  %v1339 = vadd.f32 %v1326, %v1337
  %1341 = vrot.lane.b32.xlu0 %v1339, 64
  %v1342 = vpop.permute.xlu0 %1341
  %v1344 = vmul.f32 %v1335, %v1342
  %1346 = vrot.lane.b32.xlu0 %v1344, 64
  %v1347 = vpop.permute.xlu0 %1346
  %v1349 = vadd.f32 %v1258, %v1347
  %v1350 = vtanh.pop %v1349
  %v1351 = vsub.f32 0.0, %v1350
  %1353 = vrot.lane.b32.xlu0 %v1351, 96
  %v1354 = vpop.permute.xlu0 %1353
  %v1356 = vmul.f32 %v1335, %v1354
  %1358 = vrot.lane.b32.xlu0 %v1356, 32
  %v1359 = vpop.permute.xlu0 %1358
  %v1361 = vadd.f32 %v1350, %v1359
  %v1362 = vld [vmem:[%s322] sm:$0xff]
  %1364 = vrot.lane.b32.xlu0 %v1361, 64
  %v1365 = vpop.permute.xlu0 %1364
  %v1366 = vsel %vm210, %v1365, 0
  %1368 = vmatprep.subr.mxu0 0.0
  %1369 = vmatpush1.msra.mxu0 %v1248
  %1370 = vmatprep.subr.mxu0 0.0
  %1371 = vmatpush1.msra.mxu0 %v1249
  %1372 = vmatprep.subr.mxu0 0.0
  %1373 = vmatpush1.msra.mxu0 %v1250
  %1374 = vmatprep.subr.mxu0 0.0
  %1375 = vmatpush1.msra.mxu0 %v1251
  %1376 = vmatprep.subr.mxu0 0.0
  %1377 = vmatpush1.msra.mxu0 0.0
  %1378 = vmatprep.subr.mxu0 0.0
  %1379 = vmatpush1.msra.mxu0 0.0
  %1380 = vmatprep.subr.mxu0 0.0
  %1381 = vmatpush1.msra.mxu0 0.0
  %1382 = vmatprep.subr.mxu0 0.0
  %1383 = vmatpush1.msra.mxu0 0.0
  %1384 = vmatprep.subr.mxu0 0.0
  %1385 = vmatpush1.msra.mxu0 0.0
  %1386 = vmatprep.subr.mxu0 0.0
  %1387 = vmatpush1.msra.mxu0 0.0
  %1388 = vmatprep.subr.mxu0 0.0
  %1389 = vmatpush1.msra.mxu0 0.0
  %1390 = vmatprep.subr.mxu0 0.0
  %1391 = vmatpush1.msra.mxu0 0.0
  %1392 = vmatprep.subr.mxu0 0.0
  %1393 = vmatpush1.msra.mxu0 0.0
  %1394 = vmatprep.subr.mxu0 0.0
  %1395 = vmatpush1.msra.mxu0 0.0
  %1396 = vmatprep.subr.mxu0 0.0
  %1397 = vmatpush1.msra.mxu0 0.0
  %1398 = vmatprep.subr.mxu0 0.0
  %1399 = vmatpush1.msra.mxu0 0.0
  %1400 = vmatprep.subr.mxu0 0.0
  %1401 = vmatpush1.msra.mxu0 0.0
  %1402 = vmatprep.subr.mxu0 0.0
  %1403 = vmatpush1.msra.mxu0 0.0
  %1404 = vmatprep.subr.mxu0 0.0
  %1405 = vmatpush1.msra.mxu0 0.0
  %1406 = vmatprep.subr.mxu0 0.0
  %1407 = vmatpush1.msra.mxu0 0.0
  %1408 = vmatprep.subr.mxu0 0.0
  %1409 = vmatpush1.msra.mxu0 0.0
  %1410 = vmatprep.subr.mxu0 0.0
  %1411 = vmatpush1.msra.mxu0 0.0
  %1412 = vmatprep.subr.mxu0 0.0
  %1413 = vmatpush1.msra.mxu0 0.0
  %1414 = vmatprep.subr.mxu0 0.0
  %1415 = vmatpush1.msra.mxu0 0.0
  %1416 = vmatprep.subr.mxu0 0.0
  %1417 = vmatpush1.msra.mxu0 0.0
  %1418 = vmatprep.subr.mxu0 0.0
  %1419 = vmatpush1.msra.mxu0 0.0
  %1420 = vmatprep.subr.mxu0 0.0
  %1421 = vmatpush1.msra.mxu0 0.0
  %1422 = vmatprep.subr.mxu0 0.0
  %1423 = vmatpush1.msra.mxu0 0.0
  %1424 = vmatprep.subr.mxu0 0.0
  %1425 = vmatpush1.msra.mxu0 0.0
  %1426 = vmatprep.subr.mxu0 0.0
  %1427 = vmatpush1.msra.mxu0 0.0
  %1428 = vmatprep.subr.mxu0 0.0
  %1429 = vmatpush1.msra.mxu0 0.0
  %1430 = vmatprep.subr.mxu0 0.0
  %1431 = vmatpush1.msra.mxu0 0.0
  %1432 = vmatprep.mubr.f32.mxu0 0.0
  %1433 = vmatmul.mubr.f32.gmra.mrb[0].mxu0 %v1366
  %v1434 = vpop.f32.mrb[0].mxu0
  %v1435 = vadd.f32 0.0, %v1434
  %v1436 = vpop.f32.mrb[0].mxu0
  %1437 = vdwg.mxu0
  %v1438 = vadd.f32 %v1362, %v1435
  %v1439 = vxor.u32 %v1438, 2147483648
  %v1440 = vmul.f32 %v1439, 1.442695
  %v1441 = vpow.pop %v1440
  %v1442 = vadd.f32 %v1441, 1.0
  %v1443 = vrcp.pop %v1442
  %v1444 = vmul.f32 1.0, %v1443
  %v1445 = vadd.f32 %v1435, %v1337
  %1447 = vrot.lane.b32.xlu0 %v1445, 64
  %v1448 = vpop.permute.xlu0 %1447
  %v1450 = vmul.f32 %v1444, %v1448
  %1452 = vrot.lane.b32.xlu0 %v1450, 64
  %v1453 = vpop.permute.xlu0 %1452
  %v1455 = vadd.f32 %v1362, %v1453
  %v1456 = vtanh.pop %v1455
  %v1457 = vsub.f32 %v1361, %v1456
  %1459 = vrot.lane.b32.xlu0 %v1457, 96
  %v1460 = vpop.permute.xlu0 %1459
  %v1462 = vmul.f32 %v1444, %v1460
  %1464 = vrot.lane.b32.xlu0 %v1462, 32
  %v1465 = vpop.permute.xlu0 %1464
  %v1467 = vadd.f32 %v1456, %v1465
  %v1468 = vld [vmem:[%s432] sm:$0xff]
  %1470 = vrot.lane.b32.xlu0 %v1467, 64
  %v1471 = vpop.permute.xlu0 %1470
  %v1472 = vsel %vm210, %v1471, 0
  %1474 = vmatprep.subr.mxu0 0.0
  %1475 = vmatpush1.msra.mxu0 %v1248
  %1476 = vmatprep.subr.mxu0 0.0
  %1477 = vmatpush1.msra.mxu0 %v1249
  %1478 = vmatprep.subr.mxu0 0.0
  %1479 = vmatpush1.msra.mxu0 %v1250
  %1480 = vmatprep.subr.mxu0 0.0
  %1481 = vmatpush1.msra.mxu0 %v1251
  %1482 = vmatprep.subr.mxu0 0.0
  %1483 = vmatpush1.msra.mxu0 0.0
  %1484 = vmatprep.subr.mxu0 0.0
  %1485 = vmatpush1.msra.mxu0 0.0
  %1486 = vmatprep.subr.mxu0 0.0
  %1487 = vmatpush1.msra.mxu0 0.0
  %1488 = vmatprep.subr.mxu0 0.0
  %1489 = vmatpush1.msra.mxu0 0.0
  %1490 = vmatprep.subr.mxu0 0.0
  %1491 = vmatpush1.msra.mxu0 0.0
  %1492 = vmatprep.subr.mxu0 0.0
  %1493 = vmatpush1.msra.mxu0 0.0
  %1494 = vmatprep.subr.mxu0 0.0
  %1495 = vmatpush1.msra.mxu0 0.0
  %1496 = vmatprep.subr.mxu0 0.0
  %1497 = vmatpush1.msra.mxu0 0.0
  %1498 = vmatprep.subr.mxu0 0.0
  %1499 = vmatpush1.msra.mxu0 0.0
  %1500 = vmatprep.subr.mxu0 0.0
  %1501 = vmatpush1.msra.mxu0 0.0
  %1502 = vmatprep.subr.mxu0 0.0
  %1503 = vmatpush1.msra.mxu0 0.0
  %1504 = vmatprep.subr.mxu0 0.0
  %1505 = vmatpush1.msra.mxu0 0.0
  %1506 = vmatprep.subr.mxu0 0.0
  %1507 = vmatpush1.msra.mxu0 0.0
  %1508 = vmatprep.subr.mxu0 0.0
  %1509 = vmatpush1.msra.mxu0 0.0
  %1510 = vmatprep.subr.mxu0 0.0
  %1511 = vmatpush1.msra.mxu0 0.0
  %1512 = vmatprep.subr.mxu0 0.0
  %1513 = vmatpush1.msra.mxu0 0.0
  %1514 = vmatprep.subr.mxu0 0.0
  %1515 = vmatpush1.msra.mxu0 0.0
  %1516 = vmatprep.subr.mxu0 0.0
  %1517 = vmatpush1.msra.mxu0 0.0
  %1518 = vmatprep.subr.mxu0 0.0
  %1519 = vmatpush1.msra.mxu0 0.0
  %1520 = vmatprep.subr.mxu0 0.0
  %1521 = vmatpush1.msra.mxu0 0.0
  %1522 = vmatprep.subr.mxu0 0.0
  %1523 = vmatpush1.msra.mxu0 0.0
  %1524 = vmatprep.subr.mxu0 0.0
  %1525 = vmatpush1.msra.mxu0 0.0
  %1526 = vmatprep.subr.mxu0 0.0
  %1527 = vmatpush1.msra.mxu0 0.0
  %1528 = vmatprep.subr.mxu0 0.0
  %1529 = vmatpush1.msra.mxu0 0.0
  %1530 = vmatprep.subr.mxu0 0.0
  %1531 = vmatpush1.msra.mxu0 0.0
  %1532 = vmatprep.subr.mxu0 0.0
  %1533 = vmatpush1.msra.mxu0 0.0
  %1534 = vmatprep.subr.mxu0 0.0
  %1535 = vmatpush1.msra.mxu0 0.0
  %1536 = vmatprep.subr.mxu0 0.0
  %1537 = vmatpush1.msra.mxu0 0.0
  %1538 = vmatprep.mubr.f32.mxu0 0.0
  %1539 = vmatmul.mubr.f32.gmra.mrb[0].mxu0 %v1472
  %v1540 = vpop.f32.mrb[0].mxu0
  %v1541 = vadd.f32 0.0, %v1540
  %v1542 = vpop.f32.mrb[0].mxu0
  %1543 = vdwg.mxu0
  %v1544 = vadd.f32 %v1468, %v1541
  %v1545 = vxor.u32 %v1544, 2147483648
  %v1546 = vmul.f32 %v1545, 1.442695
  %v1547 = vpow.pop %v1546
  %v1548 = vadd.f32 %v1547, 1.0
  %v1549 = vrcp.pop %v1548
  %v1550 = vmul.f32 1.0, %v1549
  %v1551 = vadd.f32 %v1541, %v1337
  %1553 = vrot.lane.b32.xlu0 %v1551, 64
  %v1554 = vpop.permute.xlu0 %1553
  %v1556 = vmul.f32 %v1550, %v1554
  %1558 = vrot.lane.b32.xlu0 %v1556, 64
  %v1559 = vpop.permute.xlu0 %1558
  %v1561 = vadd.f32 %v1468, %v1559
  %v1562 = vtanh.pop %v1561
  %v1563 = vsub.f32 %v1467, %v1562
  %1565 = vrot.lane.b32.xlu0 %v1563, 96
  %v1566 = vpop.permute.xlu0 %1565
  %v1568 = vmul.f32 %v1550, %v1566
  %1570 = vrot.lane.b32.xlu0 %v1568, 32
  %v1571 = vpop.permute.xlu0 %1570
  %v1573 = vadd.f32 %v1562, %v1571
  %v1574 = vld [vmem:[%s542] sm:$0xff]
  %1576 = vrot.lane.b32.xlu0 %v1573, 64
  %v1577 = vpop.permute.xlu0 %1576
  %v1578 = vsel %vm210, %v1577, 0
  %1580 = vmatprep.subr.mxu0 0.0
  %1581 = vmatpush1.msra.mxu0 %v1248
  %1582 = vmatprep.subr.mxu0 0.0
  %1583 = vmatpush1.msra.mxu0 %v1249
  %1584 = vmatprep.subr.mxu0 0.0
  %1585 = vmatpush1.msra.mxu0 %v1250
  %1586 = vmatprep.subr.mxu0 0.0
  %1587 = vmatpush1.msra.mxu0 %v1251
  %1588 = vmatprep.subr.mxu0 0.0
  %1589 = vmatpush1.msra.mxu0 0.0
  %1590 = vmatprep.subr.mxu0 0.0
  %1591 = vmatpush1.msra.mxu0 0.0
  %1592 = vmatprep.subr.mxu0 0.0
  %1593 = vmatpush1.msra.mxu0 0.0
  %1594 = vmatprep.subr.mxu0 0.0
  %1595 = vmatpush1.msra.mxu0 0.0
  %1596 = vmatprep.subr.mxu0 0.0
  %1597 = vmatpush1.msra.mxu0 0.0
  %1598 = vmatprep.subr.mxu0 0.0
  %1599 = vmatpush1.msra.mxu0 0.0
  %1600 = vmatprep.subr.mxu0 0.0
  %1601 = vmatpush1.msra.mxu0 0.0
  %1602 = vmatprep.subr.mxu0 0.0
  %1603 = vmatpush1.msra.mxu0 0.0
  %1604 = vmatprep.subr.mxu0 0.0
  %1605 = vmatpush1.msra.mxu0 0.0
  %1606 = vmatprep.subr.mxu0 0.0
  %1607 = vmatpush1.msra.mxu0 0.0
  %1608 = vmatprep.subr.mxu0 0.0
  %1609 = vmatpush1.msra.mxu0 0.0
  %1610 = vmatprep.subr.mxu0 0.0
  %1611 = vmatpush1.msra.mxu0 0.0
  %1612 = vmatprep.subr.mxu0 0.0
  %1613 = vmatpush1.msra.mxu0 0.0
  %1614 = vmatprep.subr.mxu0 0.0
  %1615 = vmatpush1.msra.mxu0 0.0
  %1616 = vmatprep.subr.mxu0 0.0
  %1617 = vmatpush1.msra.mxu0 0.0
  %1618 = vmatprep.subr.mxu0 0.0
  %1619 = vmatpush1.msra.mxu0 0.0
  %1620 = vmatprep.subr.mxu0 0.0
  %1621 = vmatpush1.msra.mxu0 0.0
  %1622 = vmatprep.subr.mxu0 0.0
  %1623 = vmatpush1.msra.mxu0 0.0
  %1624 = vmatprep.subr.mxu0 0.0
  %1625 = vmatpush1.msra.mxu0 0.0
  %1626 = vmatprep.subr.mxu0 0.0
  %1627 = vmatpush1.msra.mxu0 0.0
  %1628 = vmatprep.subr.mxu0 0.0
  %1629 = vmatpush1.msra.mxu0 0.0
  %1630 = vmatprep.subr.mxu0 0.0
  %1631 = vmatpush1.msra.mxu0 0.0
  %1632 = vmatprep.subr.mxu0 0.0
  %1633 = vmatpush1.msra.mxu0 0.0
  %1634 = vmatprep.subr.mxu0 0.0
  %1635 = vmatpush1.msra.mxu0 0.0
  %1636 = vmatprep.subr.mxu0 0.0
  %1637 = vmatpush1.msra.mxu0 0.0
  %1638 = vmatprep.subr.mxu0 0.0
  %1639 = vmatpush1.msra.mxu0 0.0
  %1640 = vmatprep.subr.mxu0 0.0
  %1641 = vmatpush1.msra.mxu0 0.0
  %1642 = vmatprep.subr.mxu0 0.0
  %1643 = vmatpush1.msra.mxu0 0.0
  %1644 = vmatprep.mubr.f32.mxu0 0.0
  %1645 = vmatmul.mubr.f32.gmra.mrb[0].mxu0 %v1578
  %v1646 = vpop.f32.mrb[0].mxu0
  %v1647 = vadd.f32 0.0, %v1646
  %v1648 = vpop.f32.mrb[0].mxu0
  %1649 = vdwg.mxu0
  %v1650 = vadd.f32 %v1574, %v1647
  %v1651 = vxor.u32 %v1650, 2147483648
  %v1652 = vmul.f32 %v1651, 1.442695
  %v1653 = vpow.pop %v1652
  %v1654 = vadd.f32 %v1653, 1.0
  %v1655 = vrcp.pop %v1654
  %v1656 = vmul.f32 1.0, %v1655
  %v1657 = vadd.f32 %v1647, %v1337
  %1659 = vrot.lane.b32.xlu0 %v1657, 64
  %v1660 = vpop.permute.xlu0 %1659
  %v1662 = vmul.f32 %v1656, %v1660
  %1664 = vrot.lane.b32.xlu0 %v1662, 64
  %v1665 = vpop.permute.xlu0 %1664
  %v1667 = vadd.f32 %v1574, %v1665
  %v1668 = vtanh.pop %v1667
  %v1669 = vsub.f32 %v1573, %v1668
  %1671 = vrot.lane.b32.xlu0 %v1669, 96
  %v1672 = vpop.permute.xlu0 %1671
  %v1674 = vmul.f32 %v1656, %v1672
  %1676 = vrot.lane.b32.xlu0 %v1674, 32
  %v1677 = vpop.permute.xlu0 %1676
  %v1679 = vadd.f32 %v1668, %v1677
  %v1680 = vld [vmem:[%s652] sm:$0xff]
  %1682 = vrot.lane.b32.xlu0 %v1679, 64
  %v1683 = vpop.permute.xlu0 %1682
  %v1684 = vsel %vm210, %v1683, 0
  %1686 = vmatprep.subr.mxu0 0.0
  %1687 = vmatpush1.msra.mxu0 %v1248
  %1688 = vmatprep.subr.mxu0 0.0
  %1689 = vmatpush1.msra.mxu0 %v1249
  %1690 = vmatprep.subr.mxu0 0.0
  %1691 = vmatpush1.msra.mxu0 %v1250
  %1692 = vmatprep.subr.mxu0 0.0
  %1693 = vmatpush1.msra.mxu0 %v1251
  %1694 = vmatprep.subr.mxu0 0.0
  %1695 = vmatpush1.msra.mxu0 0.0
  %1696 = vmatprep.subr.mxu0 0.0
  %1697 = vmatpush1.msra.mxu0 0.0
  %1698 = vmatprep.subr.mxu0 0.0
  %1699 = vmatpush1.msra.mxu0 0.0
  %1700 = vmatprep.subr.mxu0 0.0
  %1701 = vmatpush1.msra.mxu0 0.0
  %1702 = vmatprep.subr.mxu0 0.0
  %1703 = vmatpush1.msra.mxu0 0.0
  %1704 = vmatprep.subr.mxu0 0.0
  %1705 = vmatpush1.msra.mxu0 0.0
  %1706 = vmatprep.subr.mxu0 0.0
  %1707 = vmatpush1.msra.mxu0 0.0
  %1708 = vmatprep.subr.mxu0 0.0
  %1709 = vmatpush1.msra.mxu0 0.0
  %1710 = vmatprep.subr.mxu0 0.0
  %1711 = vmatpush1.msra.mxu0 0.0
  %1712 = vmatprep.subr.mxu0 0.0
  %1713 = vmatpush1.msra.mxu0 0.0
  %1714 = vmatprep.subr.mxu0 0.0
  %1715 = vmatpush1.msra.mxu0 0.0
  %1716 = vmatprep.subr.mxu0 0.0
  %1717 = vmatpush1.msra.mxu0 0.0
  %1718 = vmatprep.subr.mxu0 0.0
  %1719 = vmatpush1.msra.mxu0 0.0
  %1720 = vmatprep.subr.mxu0 0.0
  %1721 = vmatpush1.msra.mxu0 0.0
  %1722 = vmatprep.subr.mxu0 0.0
  %1723 = vmatpush1.msra.mxu0 0.0
  %1724 = vmatprep.subr.mxu0 0.0
  %1725 = vmatpush1.msra.mxu0 0.0
  %1726 = vmatprep.subr.mxu0 0.0
  %1727 = vmatpush1.msra.mxu0 0.0
  %1728 = vmatprep.subr.mxu0 0.0
  %1729 = vmatpush1.msra.mxu0 0.0
  %1730 = vmatprep.subr.mxu0 0.0
  %1731 = vmatpush1.msra.mxu0 0.0
  %1732 = vmatprep.subr.mxu0 0.0
  %1733 = vmatpush1.msra.mxu0 0.0
  %1734 = vmatprep.subr.mxu0 0.0
  %1735 = vmatpush1.msra.mxu0 0.0
  %1736 = vmatprep.subr.mxu0 0.0
  %1737 = vmatpush1.msra.mxu0 0.0
  %1738 = vmatprep.subr.mxu0 0.0
  %1739 = vmatpush1.msra.mxu0 0.0
  %1740 = vmatprep.subr.mxu0 0.0
  %1741 = vmatpush1.msra.mxu0 0.0
  %1742 = vmatprep.subr.mxu0 0.0
  %1743 = vmatpush1.msra.mxu0 0.0
  %1744 = vmatprep.subr.mxu0 0.0
  %1745 = vmatpush1.msra.mxu0 0.0
  %1746 = vmatprep.subr.mxu0 0.0
  %1747 = vmatpush1.msra.mxu0 0.0
  %1748 = vmatprep.subr.mxu0 0.0
  %1749 = vmatpush1.msra.mxu0 0.0
  %1750 = vmatprep.mubr.f32.mxu0 0.0
  %1751 = vmatmul.mubr.f32.gmra.mrb[0].mxu0 %v1684
  %v1752 = vpop.f32.mrb[0].mxu0
  %v1753 = vadd.f32 0.0, %v1752
  %v1754 = vpop.f32.mrb[0].mxu0
  %1755 = vdwg.mxu0
  %v1756 = vadd.f32 %v1680, %v1753
  %v1757 = vxor.u32 %v1756, 2147483648
  %v1758 = vmul.f32 %v1757, 1.442695
  %v1759 = vpow.pop %v1758
  %v1760 = vadd.f32 %v1759, 1.0
  %v1761 = vrcp.pop %v1760
  %v1762 = vmul.f32 1.0, %v1761
  %v1763 = vadd.f32 %v1753, %v1337
  %1765 = vrot.lane.b32.xlu0 %v1763, 64
  %v1766 = vpop.permute.xlu0 %1765
  %v1768 = vmul.f32 %v1762, %v1766
  %1770 = vrot.lane.b32.xlu0 %v1768, 64
  %v1771 = vpop.permute.xlu0 %1770
  %v1773 = vadd.f32 %v1680, %v1771
  %v1774 = vtanh.pop %v1773
  %v1775 = vsub.f32 %v1679, %v1774
  %1777 = vrot.lane.b32.xlu0 %v1775, 96
  %v1778 = vpop.permute.xlu0 %1777
  %v1780 = vmul.f32 %v1762, %v1778
  %1782 = vrot.lane.b32.xlu0 %v1780, 32
  %v1783 = vpop.permute.xlu0 %1782
  %v1785 = vadd.f32 %v1774, %v1783
  %v1786 = vld [vmem:[%s762] sm:$0xff]
  %1788 = vrot.lane.b32.xlu0 %v1785, 64
  %v1789 = vpop.permute.xlu0 %1788
  %v1790 = vsel %vm210, %v1789, 0
  %1792 = vmatprep.subr.mxu0 0.0
  %1793 = vmatpush1.msra.mxu0 %v1248
  %1794 = vmatprep.subr.mxu0 0.0
  %1795 = vmatpush1.msra.mxu0 %v1249
  %1796 = vmatprep.subr.mxu0 0.0
  %1797 = vmatpush1.msra.mxu0 %v1250
  %1798 = vmatprep.subr.mxu0 0.0
  %1799 = vmatpush1.msra.mxu0 %v1251
  %1800 = vmatprep.subr.mxu0 0.0
  %1801 = vmatpush1.msra.mxu0 0.0
  %1802 = vmatprep.subr.mxu0 0.0
  %1803 = vmatpush1.msra.mxu0 0.0
  %1804 = vmatprep.subr.mxu0 0.0
  %1805 = vmatpush1.msra.mxu0 0.0
  %1806 = vmatprep.subr.mxu0 0.0
  %1807 = vmatpush1.msra.mxu0 0.0
  %1808 = vmatprep.subr.mxu0 0.0
  %1809 = vmatpush1.msra.mxu0 0.0
  %1810 = vmatprep.subr.mxu0 0.0
  %1811 = vmatpush1.msra.mxu0 0.0
  %1812 = vmatprep.subr.mxu0 0.0
  %1813 = vmatpush1.msra.mxu0 0.0
  %1814 = vmatprep.subr.mxu0 0.0
  %1815 = vmatpush1.msra.mxu0 0.0
  %1816 = vmatprep.subr.mxu0 0.0
  %1817 = vmatpush1.msra.mxu0 0.0
  %1818 = vmatprep.subr.mxu0 0.0
  %1819 = vmatpush1.msra.mxu0 0.0
  %1820 = vmatprep.subr.mxu0 0.0
  %1821 = vmatpush1.msra.mxu0 0.0
  %1822 = vmatprep.subr.mxu0 0.0
  %1823 = vmatpush1.msra.mxu0 0.0
  %1824 = vmatprep.subr.mxu0 0.0
  %1825 = vmatpush1.msra.mxu0 0.0
  %1826 = vmatprep.subr.mxu0 0.0
  %1827 = vmatpush1.msra.mxu0 0.0
  %1828 = vmatprep.subr.mxu0 0.0
  %1829 = vmatpush1.msra.mxu0 0.0
  %1830 = vmatprep.subr.mxu0 0.0
  %1831 = vmatpush1.msra.mxu0 0.0
  %1832 = vmatprep.subr.mxu0 0.0
  %1833 = vmatpush1.msra.mxu0 0.0
  %1834 = vmatprep.subr.mxu0 0.0
  %1835 = vmatpush1.msra.mxu0 0.0
  %1836 = vmatprep.subr.mxu0 0.0
  %1837 = vmatpush1.msra.mxu0 0.0
  %1838 = vmatprep.subr.mxu0 0.0
  %1839 = vmatpush1.msra.mxu0 0.0
  %1840 = vmatprep.subr.mxu0 0.0
  %1841 = vmatpush1.msra.mxu0 0.0
  %1842 = vmatprep.subr.mxu0 0.0
  %1843 = vmatpush1.msra.mxu0 0.0
  %1844 = vmatprep.subr.mxu0 0.0
  %1845 = vmatpush1.msra.mxu0 0.0
  %1846 = vmatprep.subr.mxu0 0.0
  %1847 = vmatpush1.msra.mxu0 0.0
  %1848 = vmatprep.subr.mxu0 0.0
  %1849 = vmatpush1.msra.mxu0 0.0
  %1850 = vmatprep.subr.mxu0 0.0
  %1851 = vmatpush1.msra.mxu0 0.0
  %1852 = vmatprep.subr.mxu0 0.0
  %1853 = vmatpush1.msra.mxu0 0.0
  %1854 = vmatprep.subr.mxu0 0.0
  %1855 = vmatpush1.msra.mxu0 0.0
  %1856 = vmatprep.mubr.f32.mxu0 0.0
  %1857 = vmatmul.mubr.f32.gmra.mrb[0].mxu0 %v1790
  %v1858 = vpop.f32.mrb[0].mxu0
  %v1859 = vadd.f32 0.0, %v1858
  %v1860 = vpop.f32.mrb[0].mxu0
  %1861 = vdwg.mxu0
  %v1862 = vadd.f32 %v1786, %v1859
  %v1863 = vxor.u32 %v1862, 2147483648
  %v1864 = vmul.f32 %v1863, 1.442695
  %v1865 = vpow.pop %v1864
  %v1866 = vadd.f32 %v1865, 1.0
  %v1867 = vrcp.pop %v1866
  %v1868 = vmul.f32 1.0, %v1867
  %v1869 = vadd.f32 %v1859, %v1337
  %1871 = vrot.lane.b32.xlu0 %v1869, 64
  %v1872 = vpop.permute.xlu0 %1871
  %v1874 = vmul.f32 %v1868, %v1872
  %1876 = vrot.lane.b32.xlu0 %v1874, 64
  %v1877 = vpop.permute.xlu0 %1876
  %v1879 = vadd.f32 %v1786, %v1877
  %v1880 = vtanh.pop %v1879
  %v1881 = vsub.f32 %v1785, %v1880
  %1883 = vrot.lane.b32.xlu0 %v1881, 96
  %v1884 = vpop.permute.xlu0 %1883
  %v1886 = vmul.f32 %v1868, %v1884
  %1888 = vrot.lane.b32.xlu0 %v1886, 32
  %v1889 = vpop.permute.xlu0 %1888
  %v1891 = vadd.f32 %v1880, %v1889
  %v1892 = vld [vmem:[%s872] sm:$0xff]
  %1894 = vrot.lane.b32.xlu0 %v1891, 64
  %v1895 = vpop.permute.xlu0 %1894
  %v1896 = vsel %vm210, %v1895, 0
  %1898 = vmatprep.subr.mxu0 0.0
  %1899 = vmatpush1.msra.mxu0 %v1248
  %1900 = vmatprep.subr.mxu0 0.0
  %1901 = vmatpush1.msra.mxu0 %v1249
  %1902 = vmatprep.subr.mxu0 0.0
  %1903 = vmatpush1.msra.mxu0 %v1250
  %1904 = vmatprep.subr.mxu0 0.0
  %1905 = vmatpush1.msra.mxu0 %v1251
  %1906 = vmatprep.subr.mxu0 0.0
  %1907 = vmatpush1.msra.mxu0 0.0
  %1908 = vmatprep.subr.mxu0 0.0
  %1909 = vmatpush1.msra.mxu0 0.0
  %1910 = vmatprep.subr.mxu0 0.0
  %1911 = vmatpush1.msra.mxu0 0.0
  %1912 = vmatprep.subr.mxu0 0.0
  %1913 = vmatpush1.msra.mxu0 0.0
  %1914 = vmatprep.subr.mxu0 0.0
  %1915 = vmatpush1.msra.mxu0 0.0
  %1916 = vmatprep.subr.mxu0 0.0
  %1917 = vmatpush1.msra.mxu0 0.0
  %1918 = vmatprep.subr.mxu0 0.0
  %1919 = vmatpush1.msra.mxu0 0.0
  %1920 = vmatprep.subr.mxu0 0.0
  %1921 = vmatpush1.msra.mxu0 0.0
  %1922 = vmatprep.subr.mxu0 0.0
  %1923 = vmatpush1.msra.mxu0 0.0
  %1924 = vmatprep.subr.mxu0 0.0
  %1925 = vmatpush1.msra.mxu0 0.0
  %1926 = vmatprep.subr.mxu0 0.0
  %1927 = vmatpush1.msra.mxu0 0.0
  %1928 = vmatprep.subr.mxu0 0.0
  %1929 = vmatpush1.msra.mxu0 0.0
  %1930 = vmatprep.subr.mxu0 0.0
  %1931 = vmatpush1.msra.mxu0 0.0
  %1932 = vmatprep.subr.mxu0 0.0
  %1933 = vmatpush1.msra.mxu0 0.0
  %1934 = vmatprep.subr.mxu0 0.0
  %1935 = vmatpush1.msra.mxu0 0.0
  %1936 = vmatprep.subr.mxu0 0.0
  %1937 = vmatpush1.msra.mxu0 0.0
  %1938 = vmatprep.subr.mxu0 0.0
  %1939 = vmatpush1.msra.mxu0 0.0
  %1940 = vmatprep.subr.mxu0 0.0
  %1941 = vmatpush1.msra.mxu0 0.0
  %1942 = vmatprep.subr.mxu0 0.0
  %1943 = vmatpush1.msra.mxu0 0.0
  %1944 = vmatprep.subr.mxu0 0.0
  %1945 = vmatpush1.msra.mxu0 0.0
  %1946 = vmatprep.subr.mxu0 0.0
  %1947 = vmatpush1.msra.mxu0 0.0
  %1948 = vmatprep.subr.mxu0 0.0
  %1949 = vmatpush1.msra.mxu0 0.0
  %1950 = vmatprep.subr.mxu0 0.0
  %1951 = vmatpush1.msra.mxu0 0.0
  %1952 = vmatprep.subr.mxu0 0.0
  %1953 = vmatpush1.msra.mxu0 0.0
  %1954 = vmatprep.subr.mxu0 0.0
  %1955 = vmatpush1.msra.mxu0 0.0
  %1956 = vmatprep.subr.mxu0 0.0
  %1957 = vmatpush1.msra.mxu0 0.0
  %1958 = vmatprep.subr.mxu0 0.0
  %1959 = vmatpush1.msra.mxu0 0.0
  %1960 = vmatprep.subr.mxu0 0.0
  %1961 = vmatpush1.msra.mxu0 0.0
  %1962 = vmatprep.mubr.f32.mxu0 0.0
  %1963 = vmatmul.mubr.f32.gmra.mrb[0].mxu0 %v1896
  %v1964 = vpop.f32.mrb[0].mxu0
  %v1965 = vadd.f32 0.0, %v1964
  %v1966 = vpop.f32.mrb[0].mxu0
  %1967 = vdwg.mxu0
  %v1968 = vadd.f32 %v1892, %v1965
  %v1969 = vxor.u32 %v1968, 2147483648
  %v1970 = vmul.f32 %v1969, 1.442695
  %v1971 = vpow.pop %v1970
  %v1972 = vadd.f32 %v1971, 1.0
  %v1973 = vrcp.pop %v1972
  %v1974 = vmul.f32 1.0, %v1973
  %v1975 = vadd.f32 %v1965, %v1337
  %1977 = vrot.lane.b32.xlu0 %v1975, 64
  %v1978 = vpop.permute.xlu0 %1977
  %v1980 = vmul.f32 %v1974, %v1978
  %1982 = vrot.lane.b32.xlu0 %v1980, 64
  %v1983 = vpop.permute.xlu0 %1982
  %v1985 = vadd.f32 %v1892, %v1983
  %v1986 = vtanh.pop %v1985
  %v1987 = vsub.f32 %v1891, %v1986
  %1989 = vrot.lane.b32.xlu0 %v1987, 96
  %v1990 = vpop.permute.xlu0 %1989
  %v1992 = vmul.f32 %v1974, %v1990
  %1994 = vrot.lane.b32.xlu0 %v1992, 32
  %v1995 = vpop.permute.xlu0 %1994
  %v1997 = vadd.f32 %v1986, %v1995
  %v1998 = vld [vmem:[%s982] sm:$0xff]
  %2000 = vrot.lane.b32.xlu0 %v1997, 64
  %v2001 = vpop.permute.xlu0 %2000
  %v2002 = vsel %vm210, %v2001, 0
  %2004 = vmatprep.subr.mxu0 0.0
  %2005 = vmatpush1.msra.mxu0 %v1248
  %2006 = vmatprep.subr.mxu0 0.0
  %2007 = vmatpush1.msra.mxu0 %v1249
  %2008 = vmatprep.subr.mxu0 0.0
  %2009 = vmatpush1.msra.mxu0 %v1250
  %2010 = vmatprep.subr.mxu0 0.0
  %2011 = vmatpush1.msra.mxu0 %v1251
  %2012 = vmatprep.subr.mxu0 0.0
  %2013 = vmatpush1.msra.mxu0 0.0
  %2014 = vmatprep.subr.mxu0 0.0
  %2015 = vmatpush1.msra.mxu0 0.0
  %2016 = vmatprep.subr.mxu0 0.0
  %2017 = vmatpush1.msra.mxu0 0.0
  %2018 = vmatprep.subr.mxu0 0.0
  %2019 = vmatpush1.msra.mxu0 0.0
  %2020 = vmatprep.subr.mxu0 0.0
  %2021 = vmatpush1.msra.mxu0 0.0
  %2022 = vmatprep.subr.mxu0 0.0
  %2023 = vmatpush1.msra.mxu0 0.0
  %2024 = vmatprep.subr.mxu0 0.0
  %2025 = vmatpush1.msra.mxu0 0.0
  %2026 = vmatprep.subr.mxu0 0.0
  %2027 = vmatpush1.msra.mxu0 0.0
  %2028 = vmatprep.subr.mxu0 0.0
  %2029 = vmatpush1.msra.mxu0 0.0
  %2030 = vmatprep.subr.mxu0 0.0
  %2031 = vmatpush1.msra.mxu0 0.0
  %2032 = vmatprep.subr.mxu0 0.0
  %2033 = vmatpush1.msra.mxu0 0.0
  %2034 = vmatprep.subr.mxu0 0.0
  %2035 = vmatpush1.msra.mxu0 0.0
  %2036 = vmatprep.subr.mxu0 0.0
  %2037 = vmatpush1.msra.mxu0 0.0
  %2038 = vmatprep.subr.mxu0 0.0
  %2039 = vmatpush1.msra.mxu0 0.0
  %2040 = vmatprep.subr.mxu0 0.0
  %2041 = vmatpush1.msra.mxu0 0.0
  %2042 = vmatprep.subr.mxu0 0.0
  %2043 = vmatpush1.msra.mxu0 0.0
  %2044 = vmatprep.subr.mxu0 0.0
  %2045 = vmatpush1.msra.mxu0 0.0
  %2046 = vmatprep.subr.mxu0 0.0
  %2047 = vmatpush1.msra.mxu0 0.0
  %2048 = vmatprep.subr.mxu0 0.0
  %2049 = vmatpush1.msra.mxu0 0.0
  %2050 = vmatprep.subr.mxu0 0.0
  %2051 = vmatpush1.msra.mxu0 0.0
  %2052 = vmatprep.subr.mxu0 0.0
  %2053 = vmatpush1.msra.mxu0 0.0
  %2054 = vmatprep.subr.mxu0 0.0
  %2055 = vmatpush1.msra.mxu0 0.0
  %2056 = vmatprep.subr.mxu0 0.0
  %2057 = vmatpush1.msra.mxu0 0.0
  %2058 = vmatprep.subr.mxu0 0.0
  %2059 = vmatpush1.msra.mxu0 0.0
  %2060 = vmatprep.subr.mxu0 0.0
  %2061 = vmatpush1.msra.mxu0 0.0
  %2062 = vmatprep.subr.mxu0 0.0
  %2063 = vmatpush1.msra.mxu0 0.0
  %2064 = vmatprep.subr.mxu0 0.0
  %2065 = vmatpush1.msra.mxu0 0.0
  %2066 = vmatprep.subr.mxu0 0.0
  %2067 = vmatpush1.msra.mxu0 0.0
  %2068 = vmatprep.mubr.f32.mxu0 0.0
  %2069 = vmatmul.mubr.f32.gmra.mrb[0].mxu0 %v2002
  %v2070 = vpop.f32.mrb[0].mxu0
  %v2071 = vadd.f32 0.0, %v2070
  %v2072 = vpop.f32.mrb[0].mxu0
  %2073 = vdwg.mxu0
  %v2074 = vadd.f32 %v1998, %v2071
  %v2075 = vxor.u32 %v2074, 2147483648
  %v2076 = vmul.f32 %v2075, 1.442695
  %v2077 = vpow.pop %v2076
  %v2078 = vadd.f32 %v2077, 1.0
  %v2079 = vrcp.pop %v2078
  %v2080 = vmul.f32 1.0, %v2079
  %v2081 = vadd.f32 %v2071, %v1337
  %2083 = vrot.lane.b32.xlu0 %v2081, 64
  %v2084 = vpop.permute.xlu0 %2083
  %v2086 = vmul.f32 %v2080, %v2084
  %2088 = vrot.lane.b32.xlu0 %v2086, 64
  %v2089 = vpop.permute.xlu0 %2088
  %v2091 = vadd.f32 %v1998, %v2089
  %v2092 = vtanh.pop %v2091
  %v2093 = vsub.f32 %v1997, %v2092
  %2095 = vrot.lane.b32.xlu0 %v2093, 96
  %v2096 = vpop.permute.xlu0 %2095
  %v2098 = vmul.f32 %v2080, %v2096
  %2100 = vrot.lane.b32.xlu0 %v2098, 32
  %v2101 = vpop.permute.xlu0 %2100
  %v2103 = vadd.f32 %v2092, %v2101
  %v2104 = vld [vmem:[%s9] sm:$0x1]
  %v2106 = vlaneseq
  %v2107 = vshrl.u32 %v2106, 7
  %v2108 = vsub.s32 0, %v2107
  %v2109 = vrot.slane %v2104, %v2108
  %2110 = vrot.lane.b32.xlu0 %v2109, 64
  %v2111 = vpop.permute.xlu0 %2110
  %v2113 = vmul.f32 %v2103, %v2111
  %2115 = vrot.lane.b32.xlu0 %v2113, 64
  %v2116 = vpop.permute.xlu0 %2115
  %v2118 = vsel %vm210, %v2116, 0.0
  %2119 = vadd.xlane.f32.xlu0 %v2118
  %v2120 = vpop.xlane.xlu0 %2119
  %v2121 = vld [vmem:[#allocation4] sm:$0x1]
  %v2123 = vlaneseq
  %v2124 = vshrl.u32 %v2123, 7
  %v2125 = vsub.s32 0, %v2124
  %v2126 = vrot.slane %v2121, %v2125
  %v2128 = vadd.f32 %v2120, %v2126
  %vm2129 = vcmask 7168
  %2130 = vst.msk [vmem:[%s11] sm:$0xff] %vm2129, %v2128
  // Predicated region
  $region46: #{gru_model_forward.1} parent=0 // pred_check
    _
  $region47: #{gru_model_forward.1} parent=0 // pred_check_branch
    %2132 = sbr.rel (0) target = $region49
  $region48: #{gru_model_forward.1} parent=0 // pred_region
    _
  $region49: #{gru_model_forward.1} parent=0 // pred_fallthru
    _
  // Predicated region
  $region50: #{gru_model_forward.1} parent=0 // pred_check
    _
  $region51: #{gru_model_forward.1} parent=0 // pred_check_branch
    %2134 = sbr.rel (0) target = $region53
  $region52: #{gru_model_forward.1} parent=0 // pred_region
    _
  $region53: #{gru_model_forward.1} parent=0 // pred_fallthru
    _

</llo_original>
